<compile_context>
chip_gen: v7x
topology: tpu7x:2x2x1
jax: 0.10.0
libtpu: 0.0.40
codegen_flags: <defaults>
</compile_context>

<pallas_src>
import functools

import jax
import jax.numpy as jnp
from jax.experimental import pallas as pl
from jax.experimental.pallas import tpu as pltpu


def _round_up(x, m):
    return ((x + m - 1) // m) * m


def _tpu_generation():
    try:
        kind = jax.devices()[0].device_kind.lower()
    except Exception:
        return "default"
    if "v5 lite" in kind or "v5lite" in kind or "v5e" in kind:
        return "v5e"
    if "v6" in kind:
        return "v6e"
    if "v7" in kind:
        return "v7x"
    return "default"


# Per-generation (row_tile, k_tile, vmem_limit_bytes).
#   v5e: 4x128 MXU, 128 MiB physical VMEM -> 128-row tiles.
#   v6e: 2x256 MXU, 128 MiB physical VMEM -> 256-row / 1024-K tiles.
#   v7x: 2x256 MXU,  64 MiB physical VMEM -> halve K tiles vs v6e.
_TILE_TABLE = {
    "v5e": (128, 512, 64 * 1024 * 1024),
    "v6e": (256, 1024, 64 * 1024 * 1024),
    "v7x": (256, 512, 32 * 1024 * 1024),
    "default": (256, 512, 32 * 1024 * 1024),
}


# --------------------------------------------------------------------------
# Kernels
# --------------------------------------------------------------------------
def _linear_kernel(x_ref, w_ref, b_ref, o_ref):
    o_ref[...] = (
        jnp.dot(x_ref[...], w_ref[...], preferred_element_type=jnp.float32)
        + b_ref[...]
    )


def _sage_proj_kernel(a_ref, h_agg_ref, h_self_ref, wcat_ref, b_ref, o_ref, acc_ref):
    k = pl.program_id(1)

    @pl.when(k == 0)
    def _():
        acc_ref[...] = jnp.zeros_like(acc_ref)

    # mean aggregation over in-neighbors: bf16 x bf16 MXU matmul, f32 accumulate
    acc_ref[...] += jnp.dot(
        a_ref[...],
        h_agg_ref[...].astype(jnp.bfloat16),
        preferred_element_type=jnp.float32,
    )

    @pl.when(k == pl.num_programs(1) - 1)
    def _():
        # fused SAGE projection: [agg | h_self] @ [W_l ; W_r] + b_l  (K = 2*H)
        cat = jnp.concatenate([acc_ref[...], h_self_ref[...]], axis=-1)
        o_ref[...] = (
            jnp.dot(cat, wcat_ref[...], preferred_element_type=jnp.float32)
            + b_ref[...]
        )


def _bn_stats_kernel(z_ref, sum_ref, sq_ref, *, tile_m, n_valid):
    i = pl.program_id(0)

    @pl.when(i == 0)
    def _():
        sum_ref[...] = jnp.zeros_like(sum_ref)
        sq_ref[...] = jnp.zeros_like(sq_ref)

    z = z_ref[...]
    rows = jax.lax.broadcasted_iota(jnp.int32, z.shape, 0) + i * tile_m
    z = jnp.where(rows < n_valid, z, 0.0)  # keep stats global over REAL nodes
    sum_ref[...] += jnp.sum(z, axis=0, keepdims=True)
    sq_ref[...] += jnp.sum(z * z, axis=0, keepdims=True)


def _bn_relu_kernel(z_ref, sum_ref, sq_ref, gamma_ref, beta_ref, o_ref, *, n_valid, eps):
    inv_n = jnp.float32(1.0 / n_valid)
    mean = sum_ref[...] * inv_n
    var = sq_ref[...] * inv_n - mean * mean  # biased var (torch training forward)
    zn = (z_ref[...] - mean) * jax.lax.rsqrt(var + eps) * gamma_ref[...] + beta_ref[...]
    # ReLU; dropout == identity.
    # TODO(synk): F.dropout defaults to training=True in the torch code;
    # stochastic masking is omitted here for determinism.
    o_ref[...] = jnp.maximum(zn, 0.0)


def _fc2_softmax_kernel(h_ref, w_ref, b_ref, o_ref, *, out_dim):
    logits = (
        jnp.dot(h_ref[...], w_ref[...], preferred_element_type=jnp.float32)
        + b_ref[...]
    )
    # mask padded logit lanes so they do not contribute to the softmax
    cols = jax.lax.broadcasted_iota(jnp.int32, logits.shape, 1)
    logits = jnp.where(cols < out_dim, logits, -1e30)
    m = jnp.max(logits, axis=-1, keepdims=True)
    e = jnp.exp(logits - m)
    denom = jnp.sum(e, axis=-1, keepdims=True)
    o_ref[...] = e * pl.reciprocal(denom, approx=True)


# --------------------------------------------------------------------------
# Parameters
# --------------------------------------------------------------------------
def init_params(key, input_dim, hidden_dim, output_dim):
    """Deterministic synthetic weights matching the module's parameter shapes."""
    ks = jax.random.split(key, 16)

    def glorot(k, fan_in, fan_out):
        lim = jnp.sqrt(6.0 / (fan_in + fan_out))
        return jax.random.uniform(k, (fan_in, fan_out), jnp.float32, -lim, lim)

    p = {}
    p["fc1_w"] = glorot(ks[0], input_dim, hidden_dim)
    p["fc1_b"] = jnp.zeros((1, hidden_dim), jnp.float32)
    for i, k0 in zip((1, 2, 3), (1, 5, 9)):
        p[f"w{i}l"] = glorot(ks[k0], hidden_dim, hidden_dim)       # lin_l (has bias)
        p[f"b{i}l"] = jnp.zeros((1, hidden_dim), jnp.float32)
        p[f"w{i}r"] = glorot(ks[k0 + 1], hidden_dim, hidden_dim)   # lin_r (no bias)
        p[f"g{i}"] = jnp.ones((1, hidden_dim), jnp.float32)        # BatchNorm gamma
        p[f"be{i}"] = jnp.zeros((1, hidden_dim), jnp.float32)      # BatchNorm beta
    p["fc2_w"] = glorot(ks[13], hidden_dim, output_dim)
    p["fc2_b"] = jnp.zeros((1, output_dim), jnp.float32)
    return p


# --------------------------------------------------------------------------
# Forward
# --------------------------------------------------------------------------
@jax.jit
def graphsage_forward(x, edge_index, params):
    n, f_in = x.shape
    hidden = params["fc1_w"].shape[1]
    out_dim = params["fc2_w"].shape[1]
    f32 = jnp.float32

    gen = _tpu_generation()
    tm_tab, tk_tab, vmem_limit = _TILE_TABLE[gen]

    # ---- padded sizes: lane-dense features, tileable node dimension ------
    fp = _round_up(f_in, 128)
    hp = _round_up(hidden, 128)
    op = _round_up(out_dim, 128)

    tm = min(tm_tab, _round_up(n, 128))
    tk = min(tk_tab, _round_up(n, 128))
    tk = max(tm, (tk // tm) * tm)            # tk must be a multiple of tm
    n_pad = _round_up(n, tk)
    n_rows = n_pad // tm
    n_k = n_pad // tk

    # ---- pad inputs / parameters -----------------------------------------
    xp = jnp.zeros((n_pad, fp), f32).at[:n, :f_in].set(x.astype(f32))

    def pad2(w, r, c):
        return jnp.zeros((r, c), f32).at[: w.shape[0], : w.shape[1]].set(w)

    fc1_w = pad2(params["fc1_w"], fp, hp)
    fc1_b = pad2(params["fc1_b"], 1, hp)
    fc2_w = pad2(params["fc2_w"], hp, op)
    fc2_b = pad2(params["fc2_b"], 1, op)

    layers = []
    for i in (1, 2, 3):
        wl = pad2(params[f"w{i}l"], hp, hp)
        wr = pad2(params[f"w{i}r"], hp, hp)
        wcat = jnp.concatenate([wl, wr], axis=0)        # (2*hp, hp), built once
        bl = pad2(params[f"b{i}l"], 1, hp)
        gamma = pad2(params[f"g{i}"], 1, hp)
        beta = pad2(params[f"be{i}"], 1, hp)
        layers.append((wcat, bl, gamma, beta))

    # ---- dense row-normalized mean-aggregation operator (bf16) ------------
    # A_mean[i, j] = count(j->i) / deg_in(i); padded rows/cols stay zero.
    src, dst = edge_index[0], edge_index[1]
    adj = jnp.zeros((n_pad, n_pad), f32).at[dst, src].add(1.0)
    deg = jnp.sum(adj, axis=1, keepdims=True)
    a_mean = (adj / jnp.maximum(deg, 1.0)).astype(jnp.bfloat16)

    # ---- compiler params ---------------------------------------------------
    parallel = pltpu.CompilerParams(
        dimension_semantics=("parallel",), vmem_limit_bytes=vmem_limit)
    par_arb = pltpu.CompilerParams(
        dimension_semantics=("parallel", "arbitrary"), vmem_limit_bytes=vmem_limit)
    arbitrary = pltpu.CompilerParams(
        dimension_semantics=("arbitrary",), vmem_limit_bytes=vmem_limit)

    # ---- fc1 ---------------------------------------------------------------
    h = pl.pallas_call(
        _linear_kernel,
        out_shape=jax.ShapeDtypeStruct((n_pad, hp), f32),
        grid_spec=pltpu.PrefetchScalarGridSpec(
            num_scalar_prefetch=0,
            grid=(n_rows,),
            in_specs=[
                pl.BlockSpec((tm, fp), lambda i: (i, 0)),
                pl.BlockSpec((fp, hp), lambda i: (0, 0)),
                pl.BlockSpec((1, hp), lambda i: (0, 0)),
            ],
            out_specs=pl.BlockSpec((tm, hp), lambda i: (i, 0)),
        ),
        compiler_params=parallel,
    )(xp, fc1_w, fc1_b)

    sage_cost = pl.CostEstimate(
        flops=2 * n_pad * n_pad * hp + 2 * n_pad * (2 * hp) * hp,
        transcendentals=0,
        bytes_accessed=2 * n_pad * n_pad + 3 * 4 * n_pad * hp + 4 * 2 * hp * hp,
    )

    def sage_layer(h, wcat, bl, gamma, beta):
        # (1) mean aggregation + fused SAGE projection (pre-BatchNorm)
        z = pl.pallas_call(
            _sage_proj_kernel,
            out_shape=jax.ShapeDtypeStruct((n_pad, hp), f32),
            grid_spec=pltpu.PrefetchScalarGridSpec(
                num_scalar_prefetch=0,
                grid=(n_rows, n_k),
                in_specs=[
                    pl.BlockSpec((tm, tk), lambda i, k: (i, k)),   # A tile (bf16)
                    pl.BlockSpec((tk, hp), lambda i, k: (k, 0)),   # H rows (agg)
                    pl.BlockSpec((tm, hp), lambda i, k: (i, 0)),   # H rows (root)
                    pl.BlockSpec((2 * hp, hp), lambda i, k: (0, 0)),
                    pl.BlockSpec((1, hp), lambda i, k: (0, 0)),
                ],
                out_specs=pl.BlockSpec((tm, hp), lambda i, k: (i, 0)),
                scratch_shapes=[pltpu.VMEM((tm, hp), jnp.float32)],
            ),
            compiler_params=par_arb,
            cost_estimate=sage_cost,
        )(a_mean, h, h, wcat, bl)

        # (2) global BatchNorm statistics (cross-tile reduction, padded rows masked)
        zsum, zsq = pl.pallas_call(
            functools.partial(_bn_stats_kernel, tile_m=tm, n_valid=n),
            out_shape=(
                jax.ShapeDtypeStruct((1, hp), f32),
                jax.ShapeDtypeStruct((1, hp), f32),
            ),
            grid_spec=pltpu.PrefetchScalarGridSpec(
                num_scalar_prefetch=0,
                grid=(n_rows,),
                in_specs=[pl.BlockSpec((tm, hp), lambda i: (i, 0))],
                out_specs=(
                    pl.BlockSpec((1, hp), lambda i: (0, 0)),
                    pl.BlockSpec((1, hp), lambda i: (0, 0)),
                ),
            ),
            compiler_params=arbitrary,
        )(z)

        # (3) BatchNorm (global stats) + ReLU (+ dropout as identity)
        return pl.pallas_call(
            functools.partial(_bn_relu_kernel, n_valid=n, eps=1e-5),
            out_shape=jax.ShapeDtypeStruct((n_pad, hp), f32),
            grid_spec=pltpu.PrefetchScalarGridSpec(
                num_scalar_prefetch=0,
                grid=(n_rows,),
                in_specs=[
                    pl.BlockSpec((tm, hp), lambda i: (i, 0)),
                    pl.BlockSpec((1, hp), lambda i: (0, 0)),
                    pl.BlockSpec((1, hp), lambda i: (0, 0)),
                    pl.BlockSpec((1, hp), lambda i: (0, 0)),
                    pl.BlockSpec((1, hp), lambda i: (0, 0)),
                ],
                out_specs=pl.BlockSpec((tm, hp), lambda i: (i, 0)),
            ),
            compiler_params=parallel,
        )(z, zsum, zsq, gamma, beta)

    for wcat, bl, gamma, beta in layers:
        h = sage_layer(h, wcat, bl, gamma, beta)

    # ---- fc2 + softmax (lane-dense padded output, sliced back below) -------
    probs = pl.pallas_call(
        functools.partial(_fc2_softmax_kernel, out_dim=out_dim),
        out_shape=jax.ShapeDtypeStruct((n_pad, op), f32),
        grid_spec=pltpu.PrefetchScalarGridSpec(
            num_scalar_prefetch=0,
            grid=(n_rows,),
            in_specs=[
                pl.BlockSpec((tm, hp), lambda i: (i, 0)),
                pl.BlockSpec((hp, op), lambda i: (0, 0)),
                pl.BlockSpec((1, op), lambda i: (0, 0)),
            ],
            out_specs=pl.BlockSpec((tm, op), lambda i: (i, 0)),
        ),
        compiler_params=parallel,
    )(h, fc2_w, fc2_b)

    return probs[:n, :out_dim]


if __name__ == "__main__":
    INPUT_DIM, HIDDEN_DIM, OUTPUT_DIM = 16, 32, 8
    NUM_NODES, NUM_EDGES = 64, 256

    key = jax.random.PRNGKey(0)
    k_x, k_e0, k_e1, k_p = jax.random.split(key, 4)

    x = jax.random.normal(k_x, (NUM_NODES, INPUT_DIM), jnp.float32)
    edge_index = jnp.stack(
        [
            jax.random.randint(k_e0, (NUM_EDGES,), 0, NUM_NODES, jnp.int32),
            jax.random.randint(k_e1, (NUM_EDGES,), 0, NUM_NODES, jnp.int32),
        ],
        axis=0,
    )
    params = init_params(k_p, INPUT_DIM, HIDDEN_DIM, OUTPUT_DIM)

    out = graphsage_forward(x, edge_index, params)
    jax.block_until_ready(out)

    assert out.shape == (NUM_NODES, OUTPUT_DIM)
    # softmax rows must sum to 1 (approx reciprocal -> slightly relaxed tol)
    assert jnp.allclose(jnp.sum(out, axis=-1), 1.0, atol=5e-3)
    print("KERNEL_OK")
</pallas_src>

<mosaic_0001>
module attributes {stable_mosaic.version = 11 : i64} {
  func.func private @main(%arg0: i32) attributes {dimension_semantics = [#tpu.dimension_semantics<core_parallel>], iteration_bounds = array<i64: 2>, tpu.core_type = #tpu.core_type<sc_scalar_subcore>, window_params = []} {
    return
  }
}

module attributes {stable_mosaic.version = 11 : i64} {
  func.func private @main(%arg0: i32) attributes {dimension_semantics = [#tpu.dimension_semantics<core_parallel>], iteration_bounds = array<i64: 2>, tpu.core_type = #tpu.core_type<sc_scalar_subcore>, window_params = []} {
    return
  }
}

module attributes {stable_mosaic.version = 11 : i64} {
  func.func @_linear_kernel(%arg0: i32, %arg1: memref<128x128xf32, #tpu.memory_space<vmem>>, %arg2: memref<128x128xf32, #tpu.memory_space<vmem>>, %arg3: memref<1x128xf32, #tpu.memory_space<vmem>>, %arg4: memref<128x128xf32, #tpu.memory_space<vmem>>) attributes {dimension_semantics = [#tpu.dimension_semantics<parallel>], iteration_bounds = array<i64: 1>, scalar_prefetch = 0 : i64, scratch_operands = 0 : i64, tpu.core_type = #tpu.core_type<tc>, window_params = [{transform_indices = @transform_0, window_bounds = array<i64: 128, 128>}, {pipeline_mode = #tpu.pipeline_mode<synchronous>, transform_indices = @transform_1, window_bounds = array<i64: 128, 128>}, {pipeline_mode = #tpu.pipeline_mode<synchronous>, transform_indices = @transform_2, window_bounds = array<i64: 1, 128>}, {transform_indices = @transform_3, window_bounds = array<i64: 128, 128>}]} {
    %c0 = arith.constant 0 : index
    %c0_0 = arith.constant 0 : index
    %0 = vector.load %arg1[%c0, %c0_0] : memref<128x128xf32, #tpu.memory_space<vmem>>, vector<128x128xf32>
    %c0_1 = arith.constant 0 : index
    %c0_2 = arith.constant 0 : index
    %1 = vector.load %arg2[%c0_1, %c0_2] : memref<128x128xf32, #tpu.memory_space<vmem>>, vector<128x128xf32>
    %cst = arith.constant dense<0.000000e+00> : vector<128x128xf32>
    %2 = tpu.matmul %0, %1, %cst {dimension_numbers = #tpu.dot_dimension_numbers<[1], [0], [0], [1], [0, 0, 1, 1], [], []>} : vector<128x128xf32>, vector<128x128xf32>, vector<128x128xf32> -> vector<128x128xf32>
    %c0_3 = arith.constant 0 : index
    %c0_4 = arith.constant 0 : index
    %3 = vector.load %arg3[%c0_3, %c0_4] : memref<1x128xf32, #tpu.memory_space<vmem>>, vector<1x128xf32>
    %4 = vector.broadcast %3 : vector<1x128xf32> to vector<128x128xf32>
    %5 = arith.addf %2, %4 : vector<128x128xf32>
    %c0_5 = arith.constant 0 : index
    %c0_6 = arith.constant 0 : index
    %6 = vector.load %arg4[%c0_5, %c0_6] : memref<128x128xf32, #tpu.memory_space<vmem>>, vector<128x128xf32>
    tpu.vector_store %arg4[%c0_5, %c0_6], %5 {strides = array<i32>} : memref<128x128xf32, #tpu.memory_space<vmem>>, vector<128x128xf32>,
    return
  }
  func.func @transform_0(%arg0: i32) -> (i32, i32) {
    %c0_i32 = arith.constant 0 : i32
    %c0_i32_0 = arith.constant 0 : i32
    return %arg0, %c0_i32 : i32, i32
  }
  func.func @transform_1(%arg0: i32) -> (i32, i32) {
    %c0_i32 = arith.constant 0 : i32
    %c0_i32_0 = arith.constant 0 : i32
    %c0_i32_1 = arith.constant 0 : i32
    return %c0_i32, %c0_i32_0 : i32, i32
  }
  func.func @transform_2(%arg0: i32) -> (i32, i32) {
    %c0_i32 = arith.constant 0 : i32
    %c0_i32_0 = arith.constant 0 : i32
    %c0_i32_1 = arith.constant 0 : i32
    return %c0_i32, %c0_i32_0 : i32, i32
  }
  func.func @transform_3(%arg0: i32) -> (i32, i32) {
    %c0_i32 = arith.constant 0 : i32
    %c0_i32_0 = arith.constant 0 : i32
    return %arg0, %c0_i32 : i32, i32
  }
}

module attributes {stable_mosaic.version = 11 : i64} {
  func.func @_bn_stats_kernel(%arg0: i32, %arg1: memref<128x128xf32, #tpu.memory_space<vmem>>, %arg2: memref<1x128xf32, #tpu.memory_space<vmem>>, %arg3: memref<1x128xf32, #tpu.memory_space<vmem>>) attributes {dimension_semantics = [#tpu.dimension_semantics<arbitrary>], iteration_bounds = array<i64: 1>, scalar_prefetch = 0 : i64, scratch_operands = 0 : i64, tpu.core_type = #tpu.core_type<tc>, window_params = [{transform_indices = @transform_0, window_bounds = array<i64: 128, 128>}, {pipeline_mode = #tpu.pipeline_mode<synchronous>, transform_indices = @transform_1, window_bounds = array<i64: 1, 128>}, {pipeline_mode = #tpu.pipeline_mode<synchronous>, transform_indices = @transform_2, window_bounds = array<i64: 1, 128>}]} {
    %c0_i32 = arith.constant 0 : i32
    %0 = arith.cmpi eq, %arg0, %c0_i32 : i32
    %1 = arith.extui %0 : i1 to i32
    %c0_i32_0 = arith.constant 0 : i32
    %2 = arith.cmpi ne, %1, %c0_i32_0 : i32
    scf.if %2 {
      %cst_12 = arith.constant 0.000000e+00 : f32
      %23 = vector.broadcast %cst_12 : f32 to vector<1x128xf32>
      %c0_13 = arith.constant 0 : index
      %c0_14 = arith.constant 0 : index
      %24 = vector.load %arg2[%c0_13, %c0_14] : memref<1x128xf32, #tpu.memory_space<vmem>>, vector<1x128xf32>
      tpu.vector_store %arg2[%c0_13, %c0_14], %23 {strides = array<i32>} : memref<1x128xf32, #tpu.memory_space<vmem>>, vector<1x128xf32>,
      %cst_15 = arith.constant 0.000000e+00 : f32
      %25 = vector.broadcast %cst_15 : f32 to vector<1x128xf32>
      %c0_16 = arith.constant 0 : index
      %c0_17 = arith.constant 0 : index
      %26 = vector.load %arg3[%c0_16, %c0_17] : memref<1x128xf32, #tpu.memory_space<vmem>>, vector<1x128xf32>
      tpu.vector_store %arg3[%c0_16, %c0_17], %25 {strides = array<i32>} : memref<1x128xf32, #tpu.memory_space<vmem>>, vector<1x128xf32>,
    } else {
    }
    %c0 = arith.constant 0 : index
    %c0_1 = arith.constant 0 : index
    %3 = vector.load %arg1[%c0, %c0_1] : memref<128x128xf32, #tpu.memory_space<vmem>>, vector<128x128xf32>
    %4 = tpu.iota {dimensions = array<i32: 0>} : vector<128x128xi32>
    %c128_i32 = arith.constant 128 : i32
    %5 = arith.muli %arg0, %c128_i32 : i32
    %6 = vector.broadcast %5 : i32 to vector<128x128xi32>
    %7 = arith.addi %4, %6 : vector<128x128xi32>
    %c64_i32 = arith.constant 64 : i32
    %8 = vector.broadcast %c64_i32 : i32 to vector<128x128xi32>
    %9 = arith.cmpi slt, %7, %8 : vector<128x128xi32>
    %cst = arith.constant 0.000000e+00 : f32
    %10 = vector.broadcast %cst : f32 to vector<128x128xf32>
    %11 = arith.select %9, %3, %10 : vector<128x128xi1>, vector<128x128xf32>
    %c0_2 = arith.constant 0 : index
    %c0_3 = arith.constant 0 : index
    %12 = vector.load %arg2[%c0_2, %c0_3] : memref<1x128xf32, #tpu.memory_space<vmem>>, vector<1x128xf32>
    %cst_4 = arith.constant dense<0.000000e+00> : vector<128xf32>
    %13 = vector.multi_reduction <add>, %11, %cst_4 [0] : vector<128x128xf32> to vector<128xf32>
    %14 = vector.shape_cast %13 : vector<128xf32> to vector<1x128xf32>
    %15 = arith.addf %12, %14 : vector<1x128xf32>
    %c0_5 = arith.constant 0 : index
    %c0_6 = arith.constant 0 : index
    %16 = vector.load %arg2[%c0_5, %c0_6] : memref<1x128xf32, #tpu.memory_space<vmem>>, vector<1x128xf32>
    tpu.vector_store %arg2[%c0_5, %c0_6], %15 {strides = array<i32>} : memref<1x128xf32, #tpu.memory_space<vmem>>, vector<1x128xf32>,
    %c0_7 = arith.constant 0 : index
    %c0_8 = arith.constant 0 : index
    %17 = vector.load %arg3[%c0_7, %c0_8] : memref<1x128xf32, #tpu.memory_space<vmem>>, vector<1x128xf32>
    %18 = arith.mulf %11, %11 : vector<128x128xf32>
    %cst_9 = arith.constant dense<0.000000e+00> : vector<128xf32>
    %19 = vector.multi_reduction <add>, %18, %cst_9 [0] : vector<128x128xf32> to vector<128xf32>
    %20 = vector.shape_cast %19 : vector<128xf32> to vector<1x128xf32>
    %21 = arith.addf %17, %20 : vector<1x128xf32>
    %c0_10 = arith.constant 0 : index
    %c0_11 = arith.constant 0 : index
    %22 = vector.load %arg3[%c0_10, %c0_11] : memref<1x128xf32, #tpu.memory_space<vmem>>, vector<1x128xf32>
    tpu.vector_store %arg3[%c0_10, %c0_11], %21 {strides = array<i32>} : memref<1x128xf32, #tpu.memory_space<vmem>>, vector<1x128xf32>,
    return
  }
  func.func @transform_0(%arg0: i32) -> (i32, i32) {
    %c0_i32 = arith.constant 0 : i32
    %c0_i32_0 = arith.constant 0 : i32
    return %arg0, %c0_i32 : i32, i32
  }
  func.func @transform_1(%arg0: i32) -> (i32, i32) {
    %c0_i32 = arith.constant 0 : i32
    %c0_i32_0 = arith.constant 0 : i32
    %c0_i32_1 = arith.constant 0 : i32
    return %c0_i32, %c0_i32_0 : i32, i32
  }
  func.func @transform_2(%arg0: i32) -> (i32, i32) {
    %c0_i32 = arith.constant 0 : i32
    %c0_i32_0 = arith.constant 0 : i32
    %c0_i32_1 = arith.constant 0 : i32
    return %c0_i32, %c0_i32_0 : i32, i32
  }
}

module attributes {stable_mosaic.version = 11 : i64} {
  func.func @_sage_proj_kernel(%arg0: i32, %arg1: i32, %arg2: memref<128x128xbf16, #tpu.memory_space<vmem>>, %arg3: memref<128x128xf32, #tpu.memory_space<vmem>>, %arg4: memref<128x128xf32, #tpu.memory_space<vmem>>, %arg5: memref<256x128xf32, #tpu.memory_space<vmem>>, %arg6: memref<1x128xf32, #tpu.memory_space<vmem>>, %arg7: memref<128x128xf32, #tpu.memory_space<vmem>>, %arg8: memref<128x128xf32, #tpu.memory_space<vmem>>) attributes {dimension_semantics = [#tpu.dimension_semantics<parallel>, #tpu.dimension_semantics<arbitrary>], iteration_bounds = array<i64: 1, 1>, scalar_prefetch = 0 : i64, scratch_operands = 1 : i64, tpu.core_type = #tpu.core_type<tc>, window_params = [{transform_indices = @transform_0, window_bounds = array<i64: 128, 128>}, {transform_indices = @transform_1, window_bounds = array<i64: 128, 128>}, {transform_indices = @transform_2, window_bounds = array<i64: 128, 128>}, {pipeline_mode = #tpu.pipeline_mode<synchronous>, transform_indices = @transform_3, window_bounds = array<i64: 256, 128>}, {pipeline_mode = #tpu.pipeline_mode<synchronous>, transform_indices = @transform_4, window_bounds = array<i64: 1, 128>}, {transform_indices = @transform_5, window_bounds = array<i64: 128, 128>}]} {
    %c0_i32 = arith.constant 0 : i32
    %0 = arith.cmpi eq, %arg1, %c0_i32 : i32
    %1 = arith.extui %0 : i1 to i32
    %c0_i32_0 = arith.constant 0 : i32
    %2 = arith.cmpi ne, %1, %c0_i32_0 : i32
    scf.if %2 {
      %cst_10 = arith.constant 0.000000e+00 : f32
      %13 = vector.broadcast %cst_10 : f32 to vector<128x128xf32>
      %c0_11 = arith.constant 0 : index
      %c0_12 = arith.constant 0 : index
      %14 = vector.load %arg8[%c0_11, %c0_12] : memref<128x128xf32, #tpu.memory_space<vmem>>, vector<128x128xf32>
      tpu.vector_store %arg8[%c0_11, %c0_12], %13 {strides = array<i32>} : memref<128x128xf32, #tpu.memory_space<vmem>>, vector<128x128xf32>,
    } else {
    }
    %c0 = arith.constant 0 : index
    %c0_1 = arith.constant 0 : index
    %3 = vector.load %arg8[%c0, %c0_1] : memref<128x128xf32, #tpu.memory_space<vmem>>, vector<128x128xf32>
    %c0_2 = arith.constant 0 : index
    %c0_3 = arith.constant 0 : index
    %4 = vector.load %arg2[%c0_2, %c0_3] : memref<128x128xbf16, #tpu.memory_space<vmem>>, vector<128x128xbf16>
    %c0_4 = arith.constant 0 : index
    %c0_5 = arith.constant 0 : index
    %5 = vector.load %arg3[%c0_4, %c0_5] : memref<128x128xf32, #tpu.memory_space<vmem>>, vector<128x128xf32>
    %6 = arith.truncf %5 : vector<128x128xf32> to vector<128x128xbf16>
    %cst = arith.constant dense<0.000000e+00> : vector<128x128xf32>
    %7 = tpu.matmul %4, %6, %cst {dimension_numbers = #tpu.dot_dimension_numbers<[1], [0], [0], [1], [0, 0, 1, 1], [], []>} : vector<128x128xbf16>, vector<128x128xbf16>, vector<128x128xf32> -> vector<128x128xf32>
    %8 = arith.addf %3, %7 : vector<128x128xf32>
    %c0_6 = arith.constant 0 : index
    %c0_7 = arith.constant 0 : index
    %9 = vector.load %arg8[%c0_6, %c0_7] : memref<128x128xf32, #tpu.memory_space<vmem>>, vector<128x128xf32>
    tpu.vector_store %arg8[%c0_6, %c0_7], %8 {strides = array<i32>} : memref<128x128xf32, #tpu.memory_space<vmem>>, vector<128x128xf32>,
    %c0_i32_8 = arith.constant 0 : i32
    %10 = arith.cmpi eq, %arg1, %c0_i32_8 : i32
    %11 = arith.extui %10 : i1 to i32
    %c0_i32_9 = arith.constant 0 : i32
    %12 = arith.cmpi ne, %11, %c0_i32_9 : i32
    scf.if %12 {
      %c0_10 = arith.constant 0 : index
      %c0_11 = arith.constant 0 : index
      %13 = vector.load %arg8[%c0_10, %c0_11] : memref<128x128xf32, #tpu.memory_space<vmem>>, vector<128x128xf32>
      %c0_12 = arith.constant 0 : index
      %c0_13 = arith.constant 0 : index
      %14 = vector.load %arg4[%c0_12, %c0_13] : memref<128x128xf32, #tpu.memory_space<vmem>>, vector<128x128xf32>
      %15 = tpu.concatenate %13, %14 in 1 : vector<128x128xf32>, vector<128x128xf32> -> vector<128x256xf32>
      %c0_14 = arith.constant 0 : index
      %c0_15 = arith.constant 0 : index
      %16 = vector.load %arg5[%c0_14, %c0_15] : memref<256x128xf32, #tpu.memory_space<vmem>>, vector<256x128xf32>
      %cst_16 = arith.constant dense<0.000000e+00> : vector<128x128xf32>
      %17 = tpu.matmul %15, %16, %cst_16 {dimension_numbers = #tpu.dot_dimension_numbers<[1], [0], [0], [1], [0, 0, 1, 1], [], []>} : vector<128x256xf32>, vector<256x128xf32>, vector<128x128xf32> -> vector<128x128xf32>
      %c0_17 = arith.constant 0 : index
      %c0_18 = arith.constant 0 : index
      %18 = vector.load %arg6[%c0_17, %c0_18] : memref<1x128xf32, #tpu.memory_space<vmem>>, vector<1x128xf32>
      %19 = vector.broadcast %18 : vector<1x128xf32> to vector<128x128xf32>
      %20 = arith.addf %17, %19 : vector<128x128xf32>
      %c0_19 = arith.constant 0 : index
      %c0_20 = arith.constant 0 : index
      %21 = vector.load %arg7[%c0_19, %c0_20] : memref<128x128xf32, #tpu.memory_space<vmem>>, vector<128x128xf32>
      tpu.vector_store %arg7[%c0_19, %c0_20], %20 {strides = array<i32>} : memref<128x128xf32, #tpu.memory_space<vmem>>, vector<128x128xf32>,
    } else {
    }
    return
  }
  func.func @transform_0(%arg0: i32, %arg1: i32) -> (i32, i32) {
    %c0_i32 = arith.constant 0 : i32
    return %arg0, %arg1 : i32, i32
  }
  func.func @transform_1(%arg0: i32, %arg1: i32) -> (i32, i32) {
    %c0_i32 = arith.constant 0 : i32
    %c0_i32_0 = arith.constant 0 : i32
    return %arg1, %c0_i32 : i32, i32
  }
  func.func @transform_2(%arg0: i32, %arg1: i32) -> (i32, i32) {
    %c0_i32 = arith.constant 0 : i32
    %c0_i32_0 = arith.constant 0 : i32
    return %arg0, %c0_i32 : i32, i32
  }
  func.func @transform_3(%arg0: i32, %arg1: i32) -> (i32, i32) {
    %c0_i32 = arith.constant 0 : i32
    %c0_i32_0 = arith.constant 0 : i32
    %c0_i32_1 = arith.constant 0 : i32
    return %c0_i32, %c0_i32_0 : i32, i32
  }
  func.func @transform_4(%arg0: i32, %arg1: i32) -> (i32, i32) {
    %c0_i32 = arith.constant 0 : i32
    %c0_i32_0 = arith.constant 0 : i32
    %c0_i32_1 = arith.constant 0 : i32
    return %c0_i32, %c0_i32_0 : i32, i32
  }
  func.func @transform_5(%arg0: i32, %arg1: i32) -> (i32, i32) {
    %c0_i32 = arith.constant 0 : i32
    %c0_i32_0 = arith.constant 0 : i32
    return %arg0, %c0_i32 : i32, i32
  }
}

module attributes {stable_mosaic.version = 11 : i64} {
  func.func @_fc2_softmax_kernel(%arg0: i32, %arg1: memref<128x128xf32, #tpu.memory_space<vmem>>, %arg2: memref<128x128xf32, #tpu.memory_space<vmem>>, %arg3: memref<1x128xf32, #tpu.memory_space<vmem>>, %arg4: memref<128x128xf32, #tpu.memory_space<vmem>>) attributes {dimension_semantics = [#tpu.dimension_semantics<parallel>], iteration_bounds = array<i64: 1>, scalar_prefetch = 0 : i64, scratch_operands = 0 : i64, tpu.core_type = #tpu.core_type<tc>, window_params = [{transform_indices = @transform_0, window_bounds = array<i64: 128, 128>}, {pipeline_mode = #tpu.pipeline_mode<synchronous>, transform_indices = @transform_1, window_bounds = array<i64: 128, 128>}, {pipeline_mode = #tpu.pipeline_mode<synchronous>, transform_indices = @transform_2, window_bounds = array<i64: 1, 128>}, {transform_indices = @transform_3, window_bounds = array<i64: 128, 128>}]} {
    %c0 = arith.constant 0 : index
    %c0_0 = arith.constant 0 : index
    %0 = vector.load %arg1[%c0, %c0_0] : memref<128x128xf32, #tpu.memory_space<vmem>>, vector<128x128xf32>
    %c0_1 = arith.constant 0 : index
    %c0_2 = arith.constant 0 : index
    %1 = vector.load %arg2[%c0_1, %c0_2] : memref<128x128xf32, #tpu.memory_space<vmem>>, vector<128x128xf32>
    %cst = arith.constant dense<0.000000e+00> : vector<128x128xf32>
    %2 = tpu.matmul %0, %1, %cst {dimension_numbers = #tpu.dot_dimension_numbers<[1], [0], [0], [1], [0, 0, 1, 1], [], []>} : vector<128x128xf32>, vector<128x128xf32>, vector<128x128xf32> -> vector<128x128xf32>
    %c0_3 = arith.constant 0 : index
    %c0_4 = arith.constant 0 : index
    %3 = vector.load %arg3[%c0_3, %c0_4] : memref<1x128xf32, #tpu.memory_space<vmem>>, vector<1x128xf32>
    %4 = vector.broadcast %3 : vector<1x128xf32> to vector<128x128xf32>
    %5 = arith.addf %2, %4 : vector<128x128xf32>
    %6 = tpu.iota {dimensions = array<i32: 1>} : vector<128x128xi32>
    %c8_i32 = arith.constant 8 : i32
    %7 = vector.broadcast %c8_i32 : i32 to vector<128x128xi32>
    %8 = arith.cmpi slt, %6, %7 : vector<128x128xi32>
    %cst_5 = arith.constant -1.000000e+30 : f32
    %9 = vector.broadcast %cst_5 : f32 to vector<128x128xf32>
    %10 = arith.select %8, %5, %9 : vector<128x128xi1>, vector<128x128xf32>
    %cst_6 = arith.constant dense<0xFF800000> : vector<128xf32>
    %11 = vector.multi_reduction <maximumf>, %10, %cst_6 [1] : vector<128x128xf32> to vector<128xf32>
    %12 = vector.shape_cast %11 : vector<128xf32> to vector<128x1xf32>
    %13 = vector.broadcast %12 : vector<128x1xf32> to vector<128x128xf32>
    %14 = arith.subf %10, %13 : vector<128x128xf32>
    %15 = math.exp %14 : vector<128x128xf32>
    %cst_7 = arith.constant dense<0.000000e+00> : vector<128xf32>
    %16 = vector.multi_reduction <add>, %15, %cst_7 [1] : vector<128x128xf32> to vector<128xf32>
    %17 = vector.shape_cast %16 : vector<128xf32> to vector<128x1xf32>
    %18 = tpu.reciprocal %17 {approx = true} : vector<128x1xf32> -> vector<128x1xf32>
    %19 = vector.broadcast %18 : vector<128x1xf32> to vector<128x128xf32>
    %20 = arith.mulf %15, %19 : vector<128x128xf32>
    %c0_8 = arith.constant 0 : index
    %c0_9 = arith.constant 0 : index
    %21 = vector.load %arg4[%c0_8, %c0_9] : memref<128x128xf32, #tpu.memory_space<vmem>>, vector<128x128xf32>
    tpu.vector_store %arg4[%c0_8, %c0_9], %20 {strides = array<i32>} : memref<128x128xf32, #tpu.memory_space<vmem>>, vector<128x128xf32>,
    return
  }
  func.func @transform_0(%arg0: i32) -> (i32, i32) {
    %c0_i32 = arith.constant 0 : i32
    %c0_i32_0 = arith.constant 0 : i32
    return %arg0, %c0_i32 : i32, i32
  }
  func.func @transform_1(%arg0: i32) -> (i32, i32) {
    %c0_i32 = arith.constant 0 : i32
    %c0_i32_0 = arith.constant 0 : i32
    %c0_i32_1 = arith.constant 0 : i32
    return %c0_i32, %c0_i32_0 : i32, i32
  }
  func.func @transform_2(%arg0: i32) -> (i32, i32) {
    %c0_i32 = arith.constant 0 : i32
    %c0_i32_0 = arith.constant 0 : i32
    %c0_i32_1 = arith.constant 0 : i32
    return %c0_i32, %c0_i32_0 : i32, i32
  }
  func.func @transform_3(%arg0: i32) -> (i32, i32) {
    %c0_i32 = arith.constant 0 : i32
    %c0_i32_0 = arith.constant 0 : i32
    return %arg0, %c0_i32 : i32, i32
  }
}

module attributes {stable_mosaic.version = 11 : i64} {
  func.func @_bn_relu_kernel(%arg0: i32, %arg1: memref<128x128xf32, #tpu.memory_space<vmem>>, %arg2: memref<1x128xf32, #tpu.memory_space<vmem>>, %arg3: memref<1x128xf32, #tpu.memory_space<vmem>>, %arg4: memref<1x128xf32, #tpu.memory_space<vmem>>, %arg5: memref<1x128xf32, #tpu.memory_space<vmem>>, %arg6: memref<128x128xf32, #tpu.memory_space<vmem>>) attributes {dimension_semantics = [#tpu.dimension_semantics<parallel>], iteration_bounds = array<i64: 1>, scalar_prefetch = 0 : i64, scratch_operands = 0 : i64, tpu.core_type = #tpu.core_type<tc>, window_params = [{transform_indices = @transform_0, window_bounds = array<i64: 128, 128>}, {pipeline_mode = #tpu.pipeline_mode<synchronous>, transform_indices = @transform_1, window_bounds = array<i64: 1, 128>}, {pipeline_mode = #tpu.pipeline_mode<synchronous>, transform_indices = @transform_2, window_bounds = array<i64: 1, 128>}, {pipeline_mode = #tpu.pipeline_mode<synchronous>, transform_indices = @transform_3, window_bounds = array<i64: 1, 128>}, {pipeline_mode = #tpu.pipeline_mode<synchronous>, transform_indices = @transform_4, window_bounds = array<i64: 1, 128>}, {transform_indices = @transform_5, window_bounds = array<i64: 128, 128>}]} {
    %c0 = arith.constant 0 : index
    %c0_0 = arith.constant 0 : index
    %0 = vector.load %arg2[%c0, %c0_0] : memref<1x128xf32, #tpu.memory_space<vmem>>, vector<1x128xf32>
    %cst = arith.constant 1.562500e-02 : f32
    %1 = vector.broadcast %cst : f32 to vector<1x128xf32>
    %2 = arith.mulf %0, %1 : vector<1x128xf32>
    %c0_1 = arith.constant 0 : index
    %c0_2 = arith.constant 0 : index
    %3 = vector.load %arg3[%c0_1, %c0_2] : memref<1x128xf32, #tpu.memory_space<vmem>>, vector<1x128xf32>
    %cst_3 = arith.constant 1.562500e-02 : f32
    %4 = vector.broadcast %cst_3 : f32 to vector<1x128xf32>
    %5 = arith.mulf %3, %4 : vector<1x128xf32>
    %6 = arith.mulf %2, %2 : vector<1x128xf32>
    %7 = arith.subf %5, %6 : vector<1x128xf32>
    %c0_4 = arith.constant 0 : index
    %c0_5 = arith.constant 0 : index
    %8 = vector.load %arg1[%c0_4, %c0_5] : memref<128x128xf32, #tpu.memory_space<vmem>>, vector<128x128xf32>
    %9 = vector.broadcast %2 : vector<1x128xf32> to vector<128x128xf32>
    %10 = arith.subf %8, %9 : vector<128x128xf32>
    %cst_6 = arith.constant 9.99999974E-6 : f32
    %11 = vector.broadcast %cst_6 : f32 to vector<1x128xf32>
    %12 = arith.addf %7, %11 : vector<1x128xf32>
    %13 = math.rsqrt %12 : vector<1x128xf32>
    %14 = vector.broadcast %13 : vector<1x128xf32> to vector<128x128xf32>
    %15 = arith.mulf %10, %14 : vector<128x128xf32>
    %c0_7 = arith.constant 0 : index
    %c0_8 = arith.constant 0 : index
    %16 = vector.load %arg4[%c0_7, %c0_8] : memref<1x128xf32, #tpu.memory_space<vmem>>, vector<1x128xf32>
    %17 = vector.broadcast %16 : vector<1x128xf32> to vector<128x128xf32>
    %18 = arith.mulf %15, %17 : vector<128x128xf32>
    %c0_9 = arith.constant 0 : index
    %c0_10 = arith.constant 0 : index
    %19 = vector.load %arg5[%c0_9, %c0_10] : memref<1x128xf32, #tpu.memory_space<vmem>>, vector<1x128xf32>
    %20 = vector.broadcast %19 : vector<1x128xf32> to vector<128x128xf32>
    %21 = arith.addf %18, %20 : vector<128x128xf32>
    %cst_11 = arith.constant 0.000000e+00 : f32
    %22 = vector.broadcast %cst_11 : f32 to vector<128x128xf32>
    %23 = arith.maximumf %21, %22 : vector<128x128xf32>
    %c0_12 = arith.constant 0 : index
    %c0_13 = arith.constant 0 : index
    %24 = vector.load %arg6[%c0_12, %c0_13] : memref<128x128xf32, #tpu.memory_space<vmem>>, vector<128x128xf32>
    tpu.vector_store %arg6[%c0_12, %c0_13], %23 {strides = array<i32>} : memref<128x128xf32, #tpu.memory_space<vmem>>, vector<128x128xf32>,
    return
  }
  func.func @transform_0(%arg0: i32) -> (i32, i32) {
    %c0_i32 = arith.constant 0 : i32
    %c0_i32_0 = arith.constant 0 : i32
    return %arg0, %c0_i32 : i32, i32
  }
  func.func @transform_1(%arg0: i32) -> (i32, i32) {
    %c0_i32 = arith.constant 0 : i32
    %c0_i32_0 = arith.constant 0 : i32
    %c0_i32_1 = arith.constant 0 : i32
    return %c0_i32, %c0_i32_0 : i32, i32
  }
  func.func @transform_2(%arg0: i32) -> (i32, i32) {
    %c0_i32 = arith.constant 0 : i32
    %c0_i32_0 = arith.constant 0 : i32
    %c0_i32_1 = arith.constant 0 : i32
    return %c0_i32, %c0_i32_0 : i32, i32
  }
  func.func @transform_3(%arg0: i32) -> (i32, i32) {
    %c0_i32 = arith.constant 0 : i32
    %c0_i32_0 = arith.constant 0 : i32
    %c0_i32_1 = arith.constant 0 : i32
    return %c0_i32, %c0_i32_0 : i32, i32
  }
  func.func @transform_4(%arg0: i32) -> (i32, i32) {
    %c0_i32 = arith.constant 0 : i32
    %c0_i32_0 = arith.constant 0 : i32
    %c0_i32_1 = arith.constant 0 : i32
    return %c0_i32, %c0_i32_0 : i32, i32
  }
  func.func @transform_5(%arg0: i32) -> (i32, i32) {
    %c0_i32 = arith.constant 0 : i32
    %c0_i32_0 = arith.constant 0 : i32
    return %arg0, %c0_i32 : i32, i32
  }
}

</mosaic_0001>

<llo_original>
// kernel: graphsage_forward.11
$region0: #{graphsage_forward.11}
  #allocation0 [shape = 'u32[]', space=smem, size = 0x4, offset = 0x4, fixed_abs, tag = 'smem constant byte address 0x4 - core index']
  #allocation1 [shape = 'u32[144,128]{1,0:T(1,128)}', space=vmem, size = 0x12000, scoped, tag = 'internal scratch']
  %s0 = inlined_call_operand.vmem [shape: f32[128,128], index: 0, kind: input, shape index: {}]
  %s1 = inlined_call_operand.vmem [shape: f32[128,128], index: 1, kind: input, shape index: {}]
  %s2 = inlined_call_operand.vmem [shape: f32[1,128], index: 2, kind: input, shape index: {}]
  %s3 = inlined_call_operand.vmem [shape: f32[128,128], index: 3, kind: output, shape index: {}]
  %s4 = sld [smem:[#allocation0]]
  $region22: #{graphsage_forward.11} parent=0
    _
  %s6 = ssub.s32 1, %s4
  %s7 = scalar_select 0, %s6, %s4
  // Predicated region
  $region2: #{graphsage_forward.11} parent=0 // pred_check
    _
  $region3: #{graphsage_forward.11} parent=0 // pred_check_branch
    %9 = sbr.rel (0) target = $region5
  $region4: #{graphsage_forward.11} parent=0 // pred_region
    _
  $region5: #{graphsage_forward.11} parent=0 // pred_fallthru
    _
  // Predicated region
  $region6: #{graphsage_forward.11} parent=0 // pred_check
    _
  $region7: #{graphsage_forward.11} parent=0 // pred_check_branch
    %11 = sbr.rel (0) target = $region9
  $region8: #{graphsage_forward.11} parent=0 // pred_region
    _
  $region9: #{graphsage_forward.11} parent=0 // pred_fallthru
    _
  // Predicated region
  $region10: #{graphsage_forward.11} parent=0 // pred_check
    _
  $region11: #{graphsage_forward.11} parent=0 // pred_check_branch
    %13 = sbr.rel (0) target = $region13
  $region12: #{graphsage_forward.11} parent=0 // pred_region
    _
  $region13: #{graphsage_forward.11} parent=0 // pred_fallthru
    _
  %v14 = vld [vmem:[%s0] sm:$0xff]
  %v15 = vld [vmem:[%s0 + $0x8] sm:$0xff]
  %v16 = vld [vmem:[%s0 + $0x10] sm:$0xff]
  %v17 = vld [vmem:[%s0 + $0x18] sm:$0xff]
  %v18 = vld [vmem:[%s0 + $0x20] sm:$0xff]
  %v19 = vld [vmem:[%s0 + $0x28] sm:$0xff]
  %v20 = vld [vmem:[%s0 + $0x30] sm:$0xff]
  %v21 = vld [vmem:[%s0 + $0x38] sm:$0xff]
  %v22 = vld [vmem:[%s0 + $0x40] sm:$0xff]
  %v23 = vld [vmem:[%s0 + $0x48] sm:$0xff]
  %v24 = vld [vmem:[%s0 + $0x50] sm:$0xff]
  %v25 = vld [vmem:[%s0 + $0x58] sm:$0xff]
  %v26 = vld [vmem:[%s0 + $0x60] sm:$0xff]
  %v27 = vld [vmem:[%s0 + $0x68] sm:$0xff]
  %v28 = vld [vmem:[%s0 + $0x70] sm:$0xff]
  %v29 = vld [vmem:[%s0 + $0x78] sm:$0xff]
  %v30 = vld [vmem:[%s1] sm:$0xff]
  %v31 = vld [vmem:[%s1 + $0x8] sm:$0xff]
  %v32 = vld [vmem:[%s1 + $0x10] sm:$0xff]
  %v33 = vld [vmem:[%s1 + $0x18] sm:$0xff]
  %v34 = vld [vmem:[%s1 + $0x20] sm:$0xff]
  %v35 = vld [vmem:[%s1 + $0x28] sm:$0xff]
  %v36 = vld [vmem:[%s1 + $0x30] sm:$0xff]
  %v37 = vld [vmem:[%s1 + $0x38] sm:$0xff]
  %v38 = vld [vmem:[%s1 + $0x40] sm:$0xff]
  %v39 = vld [vmem:[%s1 + $0x48] sm:$0xff]
  %v40 = vld [vmem:[%s1 + $0x50] sm:$0xff]
  %v41 = vld [vmem:[%s1 + $0x58] sm:$0xff]
  %v42 = vld [vmem:[%s1 + $0x60] sm:$0xff]
  %v43 = vld [vmem:[%s1 + $0x68] sm:$0xff]
  %v44 = vld [vmem:[%s1 + $0x70] sm:$0xff]
  %v45 = vld [vmem:[%s1 + $0x78] sm:$0xff]
  %v46 = vld [vmem:[%s2] sm:$0x1]
  %v48 = vlaneseq
  %v49 = vshrl.u32 %v48, 7
  %v50 = vsub.s32 0, %v49
  %v51 = vrot.slane %v46, %v50
  %53 = vmatprep.subr.mxu0 0.0
  %54 = vmatpush1.msra.mxu0 %v30
  %55 = vmatprep.subr.mxu0 0.0
  %56 = vmatpush1.msra.mxu0 %v31
  %57 = vmatprep.subr.mxu0 0.0
  %58 = vmatpush1.msra.mxu0 %v32
  %59 = vmatprep.subr.mxu0 0.0
  %60 = vmatpush1.msra.mxu0 %v33
  %61 = vmatprep.subr.mxu0 0.0
  %62 = vmatpush1.msra.mxu0 %v34
  %63 = vmatprep.subr.mxu0 0.0
  %64 = vmatpush1.msra.mxu0 %v35
  %65 = vmatprep.subr.mxu0 0.0
  %66 = vmatpush1.msra.mxu0 %v36
  %67 = vmatprep.subr.mxu0 0.0
  %68 = vmatpush1.msra.mxu0 %v37
  %69 = vmatprep.subr.mxu0 0.0
  %70 = vmatpush1.msra.mxu0 %v38
  %71 = vmatprep.subr.mxu0 0.0
  %72 = vmatpush1.msra.mxu0 %v39
  %73 = vmatprep.subr.mxu0 0.0
  %74 = vmatpush1.msra.mxu0 %v40
  %75 = vmatprep.subr.mxu0 0.0
  %76 = vmatpush1.msra.mxu0 %v41
  %77 = vmatprep.subr.mxu0 0.0
  %78 = vmatpush1.msra.mxu0 %v42
  %79 = vmatprep.subr.mxu0 0.0
  %80 = vmatpush1.msra.mxu0 %v43
  %81 = vmatprep.subr.mxu0 0.0
  %82 = vmatpush1.msra.mxu0 %v44
  %83 = vmatprep.subr.mxu0 0.0
  %84 = vmatpush1.msra.mxu0 %v45
  %85 = vmatprep.subr.mxu0 0.0
  %86 = vmatpush1.msra.mxu0 0.0
  %87 = vmatprep.subr.mxu0 0.0
  %88 = vmatpush1.msra.mxu0 0.0
  %89 = vmatprep.subr.mxu0 0.0
  %90 = vmatpush1.msra.mxu0 0.0
  %91 = vmatprep.subr.mxu0 0.0
  %92 = vmatpush1.msra.mxu0 0.0
  %93 = vmatprep.subr.mxu0 0.0
  %94 = vmatpush1.msra.mxu0 0.0
  %95 = vmatprep.subr.mxu0 0.0
  %96 = vmatpush1.msra.mxu0 0.0
  %97 = vmatprep.subr.mxu0 0.0
  %98 = vmatpush1.msra.mxu0 0.0
  %99 = vmatprep.subr.mxu0 0.0
  %100 = vmatpush1.msra.mxu0 0.0
  %101 = vmatprep.subr.mxu0 0.0
  %102 = vmatpush1.msra.mxu0 0.0
  %103 = vmatprep.subr.mxu0 0.0
  %104 = vmatpush1.msra.mxu0 0.0
  %105 = vmatprep.subr.mxu0 0.0
  %106 = vmatpush1.msra.mxu0 0.0
  %107 = vmatprep.subr.mxu0 0.0
  %108 = vmatpush1.msra.mxu0 0.0
  %109 = vmatprep.subr.mxu0 0.0
  %110 = vmatpush1.msra.mxu0 0.0
  %111 = vmatprep.subr.mxu0 0.0
  %112 = vmatpush1.msra.mxu0 0.0
  %113 = vmatprep.subr.mxu0 0.0
  %114 = vmatpush1.msra.mxu0 0.0
  %115 = vmatprep.subr.mxu0 0.0
  %116 = vmatpush1.msra.mxu0 0.0
  %117 = vmatprep.mubr.f32.mxu0 0.0
  %118 = vmatmul.mubr.f32.gmra.mrb[0].mxu0 %v14
  %v119 = vpop.f32.mrb[0].mxu0
  %v120 = vadd.f32 %v51, %v119
  %v121 = vpop.f32.mrb[0].mxu0
  %122 = vmatprep.mubr.f32.mxu0 0.0
  %123 = vmatmul.mubr.f32.gmra.mrb[0].mxu0 %v15
  %v124 = vpop.f32.mrb[0].mxu0
  %v125 = vadd.f32 %v51, %v124
  %v126 = vpop.f32.mrb[0].mxu0
  %127 = vmatprep.mubr.f32.mxu0 0.0
  %128 = vmatmul.mubr.f32.gmra.mrb[0].mxu0 %v16
  %v129 = vpop.f32.mrb[0].mxu0
  %v130 = vadd.f32 %v51, %v129
  %v131 = vpop.f32.mrb[0].mxu0
  %132 = vmatprep.mubr.f32.mxu0 0.0
  %133 = vmatmul.mubr.f32.gmra.mrb[0].mxu0 %v17
  %v134 = vpop.f32.mrb[0].mxu0
  %v135 = vadd.f32 %v51, %v134
  %v136 = vpop.f32.mrb[0].mxu0
  %137 = vmatprep.mubr.f32.mxu0 0.0
  %138 = vmatmul.mubr.f32.gmra.mrb[0].mxu0 %v18
  %v139 = vpop.f32.mrb[0].mxu0
  %v140 = vadd.f32 %v51, %v139
  %v141 = vpop.f32.mrb[0].mxu0
  %142 = vmatprep.mubr.f32.mxu0 0.0
  %143 = vmatmul.mubr.f32.gmra.mrb[0].mxu0 %v19
  %v144 = vpop.f32.mrb[0].mxu0
  %v145 = vadd.f32 %v51, %v144
  %v146 = vpop.f32.mrb[0].mxu0
  %147 = vmatprep.mubr.f32.mxu0 0.0
  %148 = vmatmul.mubr.f32.gmra.mrb[0].mxu0 %v20
  %v149 = vpop.f32.mrb[0].mxu0
  %v150 = vadd.f32 %v51, %v149
  %v151 = vpop.f32.mrb[0].mxu0
  %152 = vmatprep.mubr.f32.mxu0 0.0
  %153 = vmatmul.mubr.f32.gmra.mrb[0].mxu0 %v21
  %v154 = vpop.f32.mrb[0].mxu0
  %v155 = vadd.f32 %v51, %v154
  %v156 = vpop.f32.mrb[0].mxu0
  %157 = vmatprep.mubr.f32.mxu0 0.0
  %158 = vmatmul.mubr.f32.gmra.mrb[0].mxu0 %v22
  %v159 = vpop.f32.mrb[0].mxu0
  %v160 = vadd.f32 %v51, %v159
  %v161 = vpop.f32.mrb[0].mxu0
  %162 = vmatprep.mubr.f32.mxu0 0.0
  %163 = vmatmul.mubr.f32.gmra.mrb[0].mxu0 %v23
  %v164 = vpop.f32.mrb[0].mxu0
  %v165 = vadd.f32 %v51, %v164
  %v166 = vpop.f32.mrb[0].mxu0
  %167 = vmatprep.mubr.f32.mxu0 0.0
  %168 = vmatmul.mubr.f32.gmra.mrb[0].mxu0 %v24
  %v169 = vpop.f32.mrb[0].mxu0
  %v170 = vadd.f32 %v51, %v169
  %v171 = vpop.f32.mrb[0].mxu0
  %172 = vmatprep.mubr.f32.mxu0 0.0
  %173 = vmatmul.mubr.f32.gmra.mrb[0].mxu0 %v25
  %v174 = vpop.f32.mrb[0].mxu0
  %v175 = vadd.f32 %v51, %v174
  %v176 = vpop.f32.mrb[0].mxu0
  %177 = vmatprep.mubr.f32.mxu0 0.0
  %178 = vmatmul.mubr.f32.gmra.mrb[0].mxu0 %v26
  %v179 = vpop.f32.mrb[0].mxu0
  %v180 = vadd.f32 %v51, %v179
  %v181 = vpop.f32.mrb[0].mxu0
  %182 = vmatprep.mubr.f32.mxu0 0.0
  %183 = vmatmul.mubr.f32.gmra.mrb[0].mxu0 %v27
  %v184 = vpop.f32.mrb[0].mxu0
  %v185 = vadd.f32 %v51, %v184
  %v186 = vpop.f32.mrb[0].mxu0
  %187 = vmatprep.mubr.f32.mxu0 0.0
  %188 = vmatmul.mubr.f32.gmra.mrb[0].mxu0 %v28
  %v189 = vpop.f32.mrb[0].mxu0
  %v190 = vadd.f32 %v51, %v189
  %v191 = vpop.f32.mrb[0].mxu0
  %192 = vmatprep.mubr.f32.mxu0 0.0
  %193 = vmatmul.mubr.f32.gmra.mrb[0].mxu0 %v29
  %v194 = vpop.f32.mrb[0].mxu0
  %v195 = vadd.f32 %v51, %v194
  %v196 = vpop.f32.mrb[0].mxu0
  %197 = vdwg.mxu0
  %198 = vst [vmem:[%s3] sm:$0xff] %v120
  %199 = vst [vmem:[%s3 + $0x8] sm:$0xff] %v125
  %200 = vst [vmem:[%s3 + $0x10] sm:$0xff] %v130
  %201 = vst [vmem:[%s3 + $0x18] sm:$0xff] %v135
  %202 = vst [vmem:[%s3 + $0x20] sm:$0xff] %v140
  %203 = vst [vmem:[%s3 + $0x28] sm:$0xff] %v145
  %204 = vst [vmem:[%s3 + $0x30] sm:$0xff] %v150
  %205 = vst [vmem:[%s3 + $0x38] sm:$0xff] %v155
  %206 = vst [vmem:[%s3 + $0x40] sm:$0xff] %v160
  %207 = vst [vmem:[%s3 + $0x48] sm:$0xff] %v165
  %208 = vst [vmem:[%s3 + $0x50] sm:$0xff] %v170
  %209 = vst [vmem:[%s3 + $0x58] sm:$0xff] %v175
  %210 = vst [vmem:[%s3 + $0x60] sm:$0xff] %v180
  %211 = vst [vmem:[%s3 + $0x68] sm:$0xff] %v185
  %212 = vst [vmem:[%s3 + $0x70] sm:$0xff] %v190
  %213 = vst [vmem:[%s3 + $0x78] sm:$0xff] %v195
  // Predicated region
  $region14: #{graphsage_forward.11} parent=0 // pred_check
    _
  $region15: #{graphsage_forward.11} parent=0 // pred_check_branch
    %215 = sbr.rel (0) target = $region17
  $region16: #{graphsage_forward.11} parent=0 // pred_region
    _
  $region17: #{graphsage_forward.11} parent=0 // pred_fallthru
    _
  // Predicated region
  $region18: #{graphsage_forward.11} parent=0 // pred_check
    _
  $region19: #{graphsage_forward.11} parent=0 // pred_check_branch
    %217 = sbr.rel (0) target = $region21
  $region20: #{graphsage_forward.11} parent=0 // pred_region
    _
  $region21: #{graphsage_forward.11} parent=0 // pred_fallthru
    _

// kernel: graphsage_forward.13
$region0: #{graphsage_forward.13}
  #allocation0 [shape = 'u32[]', space=smem, size = 0x4, offset = 0x4, fixed_abs, tag = 'smem constant byte address 0x4 - core index']
  #allocation1 [shape = 'u32[144,128]{1,0:T(1,128)}', space=vmem, size = 0x12000, scoped, tag = 'internal scratch']
  %s0 = inlined_call_operand.vmem [shape: f32[128,128], index: 0, kind: input, shape index: {}]
  %s1 = inlined_call_operand.vmem [shape: f32[1,128], index: 1, kind: output, shape index: {0}]
  %s2 = inlined_call_operand.vmem [shape: f32[1,128], index: 2, kind: output, shape index: {1}]
  %3 = xla_tuple %s1, %s2
  %s4 = sld [smem:[#allocation0]]
  $region26: #{graphsage_forward.13} parent=0
    _
  %s6 = ssub.s32 1, %s4
  %s7 = scalar_select 0, %s6, %s4
  // Predicated region
  $region2: #{graphsage_forward.13} parent=0 // pred_check
    _
  $region3: #{graphsage_forward.13} parent=0 // pred_check_branch
    %9 = sbr.rel (0) target = $region5
  $region4: #{graphsage_forward.13} parent=0 // pred_region
    _
  $region5: #{graphsage_forward.13} parent=0 // pred_fallthru
    _
  %p10 = scmp.eq.s32.totalorder 0, 0
  // Predicated region
  $region6: #{graphsage_forward.13} parent=0 // pred_check
    %p11 = pneg %p10
  $region7: #{graphsage_forward.13} parent=0 // pred_check_branch
    %13 = sbr.rel (%p11) target = $region9
  $region8: #{graphsage_forward.13} parent=0 // pred_region
    %14 = vst [vmem:[%s1] sm:$0x1] 0.0
    %15 = vst [vmem:[%s2] sm:$0x1] 0.0
  $region9: #{graphsage_forward.13} parent=0 // pred_fallthru
    _
  %v16 = vld [vmem:[%s0] sm:$0xff]
  %v17 = vld [vmem:[%s0 + $0x8] sm:$0xff]
  %v18 = vld [vmem:[%s0 + $0x10] sm:$0xff]
  %v19 = vld [vmem:[%s0 + $0x18] sm:$0xff]
  %v20 = vld [vmem:[%s0 + $0x20] sm:$0xff]
  %v21 = vld [vmem:[%s0 + $0x28] sm:$0xff]
  %v22 = vld [vmem:[%s0 + $0x30] sm:$0xff]
  %v23 = vld [vmem:[%s0 + $0x38] sm:$0xff]
  %v24 = vld [vmem:[%s0 + $0x40] sm:$0xff]
  %v25 = vld [vmem:[%s0 + $0x48] sm:$0xff]
  %v26 = vld [vmem:[%s0 + $0x50] sm:$0xff]
  %v27 = vld [vmem:[%s0 + $0x58] sm:$0xff]
  %v28 = vld [vmem:[%s0 + $0x60] sm:$0xff]
  %v29 = vld [vmem:[%s0 + $0x68] sm:$0xff]
  %v30 = vld [vmem:[%s0 + $0x70] sm:$0xff]
  %v31 = vld [vmem:[%s0 + $0x78] sm:$0xff]
  %v32 = vlaneseq
  %v33 = vshrl.u32 %v32, 7
  %v34 = vadd.s32 %v33, 8
  %v35 = vadd.s32 %v33, 16
  %v36 = vadd.s32 %v33, 24
  %v37 = vadd.s32 %v33, 32
  %v38 = vadd.s32 %v33, 40
  %v39 = vadd.s32 %v33, 48
  %v40 = vadd.s32 %v33, 56
  %v41 = vadd.s32 %v33, 64
  %v42 = vadd.s32 %v33, 72
  %v43 = vadd.s32 %v33, 80
  %v44 = vadd.s32 %v33, 88
  %v45 = vadd.s32 %v33, 96
  %v46 = vadd.s32 %v33, 104
  %v47 = vadd.s32 %v33, 112
  %v48 = vadd.s32 %v33, 120
  %s49 = smul.u32 0, 128
  %v50 = vstv %s49
  %v51 = vadd.s32 %v33, %v50
  %v52 = vadd.s32 %v34, %v50
  %v53 = vadd.s32 %v35, %v50
  %v54 = vadd.s32 %v36, %v50
  %v55 = vadd.s32 %v37, %v50
  %v56 = vadd.s32 %v38, %v50
  %v57 = vadd.s32 %v39, %v50
  %v58 = vadd.s32 %v40, %v50
  %v59 = vadd.s32 %v41, %v50
  %v60 = vadd.s32 %v42, %v50
  %v61 = vadd.s32 %v43, %v50
  %v62 = vadd.s32 %v44, %v50
  %v63 = vadd.s32 %v45, %v50
  %v64 = vadd.s32 %v46, %v50
  %v65 = vadd.s32 %v47, %v50
  %v66 = vadd.s32 %v48, %v50
  %vm67 = vcmp.lt.s32.totalorder %v51, 64
  %vm68 = vcmp.lt.s32.totalorder %v52, 64
  %vm69 = vcmp.lt.s32.totalorder %v53, 64
  %vm70 = vcmp.lt.s32.totalorder %v54, 64
  %vm71 = vcmp.lt.s32.totalorder %v55, 64
  %vm72 = vcmp.lt.s32.totalorder %v56, 64
  %vm73 = vcmp.lt.s32.totalorder %v57, 64
  %vm74 = vcmp.lt.s32.totalorder %v58, 64
  %vm75 = vcmp.lt.s32.totalorder %v59, 64
  %vm76 = vcmp.lt.s32.totalorder %v60, 64
  %vm77 = vcmp.lt.s32.totalorder %v61, 64
  %vm78 = vcmp.lt.s32.totalorder %v62, 64
  %vm79 = vcmp.lt.s32.totalorder %v63, 64
  %vm80 = vcmp.lt.s32.totalorder %v64, 64
  %vm81 = vcmp.lt.s32.totalorder %v65, 64
  %vm82 = vcmp.lt.s32.totalorder %v66, 64
  %v83 = vsel %vm67, %v16, 0.0
  %v84 = vsel %vm68, %v17, 0.0
  %v85 = vsel %vm69, %v18, 0.0
  %v86 = vsel %vm70, %v19, 0.0
  %v87 = vsel %vm71, %v20, 0.0
  %v88 = vsel %vm72, %v21, 0.0
  %v89 = vsel %vm73, %v22, 0.0
  %v90 = vsel %vm74, %v23, 0.0
  %v91 = vsel %vm75, %v24, 0.0
  %v92 = vsel %vm76, %v25, 0.0
  %v93 = vsel %vm77, %v26, 0.0
  %v94 = vsel %vm78, %v27, 0.0
  %v95 = vsel %vm79, %v28, 0.0
  %v96 = vsel %vm80, %v29, 0.0
  %v97 = vsel %vm81, %v30, 0.0
  %v98 = vsel %vm82, %v31, 0.0
  %v99 = vld [vmem:[%s1] sm:$0x1]
  %v100 = vadd.f32 %v83, %v84
  %v101 = vadd.f32 %v100, %v85
  %v102 = vadd.f32 %v101, %v86
  %v103 = vadd.f32 %v102, %v87
  %v104 = vadd.f32 %v103, %v88
  %v105 = vadd.f32 %v104, %v89
  %v106 = vadd.f32 %v105, %v90
  %v107 = vadd.f32 %v106, %v91
  %v108 = vadd.f32 %v107, %v92
  %v109 = vadd.f32 %v108, %v93
  %v110 = vadd.f32 %v109, %v94
  %v111 = vadd.f32 %v110, %v95
  %v112 = vadd.f32 %v111, %v96
  %v113 = vadd.f32 %v112, %v97
  %v114 = vadd.f32 %v113, %v98
  %v115 = vrot.slane %v114, 4
  %v116 = vadd.f32 %v114, %v115
  %v117 = vrot.slane %v116, 2
  %v118 = vadd.f32 %v116, %v117
  %v119 = vrot.slane %v118, 1
  %v120 = vadd.f32 %v118, %v119
  %v121 = vadd.f32 %v99, %v120
  %122 = vst [vmem:[%s1] sm:$0x1] %v121
  %v123 = vld [vmem:[%s2] sm:$0x1]
  %v124 = vmul.f32 %v83, %v83
  %v125 = vmul.f32 %v84, %v84
  %v126 = vmul.f32 %v85, %v85
  %v127 = vmul.f32 %v86, %v86
  %v128 = vmul.f32 %v87, %v87
  %v129 = vmul.f32 %v88, %v88
  %v130 = vmul.f32 %v89, %v89
  %v131 = vmul.f32 %v90, %v90
  %v132 = vmul.f32 %v91, %v91
  %v133 = vmul.f32 %v92, %v92
  %v134 = vmul.f32 %v93, %v93
  %v135 = vmul.f32 %v94, %v94
  %v136 = vmul.f32 %v95, %v95
  %v137 = vmul.f32 %v96, %v96
  %v138 = vmul.f32 %v97, %v97
  %v139 = vmul.f32 %v98, %v98
  %v140 = vadd.f32 %v124, %v125
  %v141 = vadd.f32 %v140, %v126
  %v142 = vadd.f32 %v141, %v127
  %v143 = vadd.f32 %v142, %v128
  %v144 = vadd.f32 %v143, %v129
  %v145 = vadd.f32 %v144, %v130
  %v146 = vadd.f32 %v145, %v131
  %v147 = vadd.f32 %v146, %v132
  %v148 = vadd.f32 %v147, %v133
  %v149 = vadd.f32 %v148, %v134
  %v150 = vadd.f32 %v149, %v135
  %v151 = vadd.f32 %v150, %v136
  %v152 = vadd.f32 %v151, %v137
  %v153 = vadd.f32 %v152, %v138
  %v154 = vadd.f32 %v153, %v139
  %v155 = vrot.slane %v154, 4
  %v156 = vadd.f32 %v154, %v155
  %v157 = vrot.slane %v156, 2
  %v158 = vadd.f32 %v156, %v157
  %v159 = vrot.slane %v158, 1
  %v160 = vadd.f32 %v158, %v159
  %v161 = vadd.f32 %v123, %v160
  %162 = vst [vmem:[%s2] sm:$0x1] %v161
  // Predicated region
  $region10: #{graphsage_forward.13} parent=0 // pred_check
    _
  $region11: #{graphsage_forward.13} parent=0 // pred_check_branch
    %164 = sbr.rel (0) target = $region13
  $region12: #{graphsage_forward.13} parent=0 // pred_region
    _
  $region13: #{graphsage_forward.13} parent=0 // pred_fallthru
    _
  // Predicated region
  $region14: #{graphsage_forward.13} parent=0 // pred_check
    _
  $region15: #{graphsage_forward.13} parent=0 // pred_check_branch
    %166 = sbr.rel (0) target = $region17
  $region16: #{graphsage_forward.13} parent=0 // pred_region
    _
  $region17: #{graphsage_forward.13} parent=0 // pred_fallthru
    _
  // Predicated region
  $region18: #{graphsage_forward.13} parent=0 // pred_check
    _
  $region19: #{graphsage_forward.13} parent=0 // pred_check_branch
    %168 = sbr.rel (0) target = $region21
  $region20: #{graphsage_forward.13} parent=0 // pred_region
    _
  $region21: #{graphsage_forward.13} parent=0 // pred_fallthru
    _
  // Predicated region
  $region22: #{graphsage_forward.13} parent=0 // pred_check
    _
  $region23: #{graphsage_forward.13} parent=0 // pred_check_branch
    %170 = sbr.rel (0) target = $region25
  $region24: #{graphsage_forward.13} parent=0 // pred_region
    _
  $region25: #{graphsage_forward.13} parent=0 // pred_fallthru
    _

// kernel: graphsage_forward.21
$region0: #{graphsage_forward.21}
  #allocation0 [shape = 'u32[]', space=smem, size = 0x4, offset = 0x4, fixed_abs, tag = 'smem constant byte address 0x4 - core index']
  #allocation1 [shape = 'u32[144,128]{1,0:T(1,128)}', space=vmem, size = 0x12000, scoped, tag = 'internal scratch']
  %s0 = inlined_call_operand.vmem [shape: f32[128,128], index: 0, kind: input, shape index: {}]
  %s1 = inlined_call_operand.vmem [shape: f32[128,128], index: 1, kind: input, shape index: {}]
  %s2 = inlined_call_operand.vmem [shape: f32[1,128], index: 2, kind: input, shape index: {}]
  %s3 = inlined_call_operand.vmem [shape: f32[128,128], index: 3, kind: output, shape index: {}]
  %s4 = sld [smem:[#allocation0]]
  $region22: #{graphsage_forward.21} parent=0
    _
  %s6 = ssub.s32 1, %s4
  %s7 = scalar_select 0, %s6, %s4
  // Predicated region
  $region2: #{graphsage_forward.21} parent=0 // pred_check
    _
  $region3: #{graphsage_forward.21} parent=0 // pred_check_branch
    %9 = sbr.rel (0) target = $region5
  $region4: #{graphsage_forward.21} parent=0 // pred_region
    _
  $region5: #{graphsage_forward.21} parent=0 // pred_fallthru
    _
  // Predicated region
  $region6: #{graphsage_forward.21} parent=0 // pred_check
    _
  $region7: #{graphsage_forward.21} parent=0 // pred_check_branch
    %11 = sbr.rel (0) target = $region9
  $region8: #{graphsage_forward.21} parent=0 // pred_region
    _
  $region9: #{graphsage_forward.21} parent=0 // pred_fallthru
    _
  // Predicated region
  $region10: #{graphsage_forward.21} parent=0 // pred_check
    _
  $region11: #{graphsage_forward.21} parent=0 // pred_check_branch
    %13 = sbr.rel (0) target = $region13
  $region12: #{graphsage_forward.21} parent=0 // pred_region
    _
  $region13: #{graphsage_forward.21} parent=0 // pred_fallthru
    _
  %v14 = vld [vmem:[%s0] sm:$0xff]
  %v15 = vld [vmem:[%s0 + $0x8] sm:$0xff]
  %v16 = vld [vmem:[%s0 + $0x10] sm:$0xff]
  %v17 = vld [vmem:[%s0 + $0x18] sm:$0xff]
  %v18 = vld [vmem:[%s0 + $0x20] sm:$0xff]
  %v19 = vld [vmem:[%s0 + $0x28] sm:$0xff]
  %v20 = vld [vmem:[%s0 + $0x30] sm:$0xff]
  %v21 = vld [vmem:[%s0 + $0x38] sm:$0xff]
  %v22 = vld [vmem:[%s0 + $0x40] sm:$0xff]
  %v23 = vld [vmem:[%s0 + $0x48] sm:$0xff]
  %v24 = vld [vmem:[%s0 + $0x50] sm:$0xff]
  %v25 = vld [vmem:[%s0 + $0x58] sm:$0xff]
  %v26 = vld [vmem:[%s0 + $0x60] sm:$0xff]
  %v27 = vld [vmem:[%s0 + $0x68] sm:$0xff]
  %v28 = vld [vmem:[%s0 + $0x70] sm:$0xff]
  %v29 = vld [vmem:[%s0 + $0x78] sm:$0xff]
  %v30 = vld [vmem:[%s1] sm:$0xff]
  %v31 = vld [vmem:[%s1 + $0x8] sm:$0xff]
  %v32 = vld [vmem:[%s1 + $0x10] sm:$0xff]
  %v33 = vld [vmem:[%s1 + $0x18] sm:$0xff]
  %v34 = vld [vmem:[%s1 + $0x20] sm:$0xff]
  %v35 = vld [vmem:[%s1 + $0x28] sm:$0xff]
  %v36 = vld [vmem:[%s1 + $0x30] sm:$0xff]
  %v37 = vld [vmem:[%s1 + $0x38] sm:$0xff]
  %v38 = vld [vmem:[%s1 + $0x40] sm:$0xff]
  %v39 = vld [vmem:[%s1 + $0x48] sm:$0xff]
  %v40 = vld [vmem:[%s1 + $0x50] sm:$0xff]
  %v41 = vld [vmem:[%s1 + $0x58] sm:$0xff]
  %v42 = vld [vmem:[%s1 + $0x60] sm:$0xff]
  %v43 = vld [vmem:[%s1 + $0x68] sm:$0xff]
  %v44 = vld [vmem:[%s1 + $0x70] sm:$0xff]
  %v45 = vld [vmem:[%s1 + $0x78] sm:$0xff]
  %v46 = vld [vmem:[%s2] sm:$0x1]
  %v48 = vlaneseq
  %v49 = vshrl.u32 %v48, 7
  %v50 = vsub.s32 0, %v49
  %v51 = vrot.slane %v46, %v50
  %53 = vmatprep.subr.mxu0 0.0
  %54 = vmatpush1.msra.mxu0 %v30
  %55 = vmatprep.subr.mxu0 0.0
  %56 = vmatpush1.msra.mxu0 %v31
  %57 = vmatprep.subr.mxu0 0.0
  %58 = vmatpush1.msra.mxu0 %v32
  %59 = vmatprep.subr.mxu0 0.0
  %60 = vmatpush1.msra.mxu0 %v33
  %61 = vmatprep.subr.mxu0 0.0
  %62 = vmatpush1.msra.mxu0 %v34
  %63 = vmatprep.subr.mxu0 0.0
  %64 = vmatpush1.msra.mxu0 %v35
  %65 = vmatprep.subr.mxu0 0.0
  %66 = vmatpush1.msra.mxu0 %v36
  %67 = vmatprep.subr.mxu0 0.0
  %68 = vmatpush1.msra.mxu0 %v37
  %69 = vmatprep.subr.mxu0 0.0
  %70 = vmatpush1.msra.mxu0 %v38
  %71 = vmatprep.subr.mxu0 0.0
  %72 = vmatpush1.msra.mxu0 %v39
  %73 = vmatprep.subr.mxu0 0.0
  %74 = vmatpush1.msra.mxu0 %v40
  %75 = vmatprep.subr.mxu0 0.0
  %76 = vmatpush1.msra.mxu0 %v41
  %77 = vmatprep.subr.mxu0 0.0
  %78 = vmatpush1.msra.mxu0 %v42
  %79 = vmatprep.subr.mxu0 0.0
  %80 = vmatpush1.msra.mxu0 %v43
  %81 = vmatprep.subr.mxu0 0.0
  %82 = vmatpush1.msra.mxu0 %v44
  %83 = vmatprep.subr.mxu0 0.0
  %84 = vmatpush1.msra.mxu0 %v45
  %85 = vmatprep.subr.mxu0 0.0
  %86 = vmatpush1.msra.mxu0 0.0
  %87 = vmatprep.subr.mxu0 0.0
  %88 = vmatpush1.msra.mxu0 0.0
  %89 = vmatprep.subr.mxu0 0.0
  %90 = vmatpush1.msra.mxu0 0.0
  %91 = vmatprep.subr.mxu0 0.0
  %92 = vmatpush1.msra.mxu0 0.0
  %93 = vmatprep.subr.mxu0 0.0
  %94 = vmatpush1.msra.mxu0 0.0
  %95 = vmatprep.subr.mxu0 0.0
  %96 = vmatpush1.msra.mxu0 0.0
  %97 = vmatprep.subr.mxu0 0.0
  %98 = vmatpush1.msra.mxu0 0.0
  %99 = vmatprep.subr.mxu0 0.0
  %100 = vmatpush1.msra.mxu0 0.0
  %101 = vmatprep.subr.mxu0 0.0
  %102 = vmatpush1.msra.mxu0 0.0
  %103 = vmatprep.subr.mxu0 0.0
  %104 = vmatpush1.msra.mxu0 0.0
  %105 = vmatprep.subr.mxu0 0.0
  %106 = vmatpush1.msra.mxu0 0.0
  %107 = vmatprep.subr.mxu0 0.0
  %108 = vmatpush1.msra.mxu0 0.0
  %109 = vmatprep.subr.mxu0 0.0
  %110 = vmatpush1.msra.mxu0 0.0
  %111 = vmatprep.subr.mxu0 0.0
  %112 = vmatpush1.msra.mxu0 0.0
  %113 = vmatprep.subr.mxu0 0.0
  %114 = vmatpush1.msra.mxu0 0.0
  %115 = vmatprep.subr.mxu0 0.0
  %116 = vmatpush1.msra.mxu0 0.0
  %117 = vmatprep.mubr.f32.mxu0 0.0
  %118 = vmatmul.mubr.f32.gmra.mrb[0].mxu0 %v14
  %v119 = vpop.f32.mrb[0].mxu0
  %v120 = vadd.f32 %v51, %v119
  %v121 = vpop.f32.mrb[0].mxu0
  %122 = vmatprep.mubr.f32.mxu0 0.0
  %123 = vmatmul.mubr.f32.gmra.mrb[0].mxu0 %v15
  %v124 = vpop.f32.mrb[0].mxu0
  %v125 = vadd.f32 %v51, %v124
  %v126 = vpop.f32.mrb[0].mxu0
  %127 = vmatprep.mubr.f32.mxu0 0.0
  %128 = vmatmul.mubr.f32.gmra.mrb[0].mxu0 %v16
  %v129 = vpop.f32.mrb[0].mxu0
  %v130 = vadd.f32 %v51, %v129
  %v131 = vpop.f32.mrb[0].mxu0
  %132 = vmatprep.mubr.f32.mxu0 0.0
  %133 = vmatmul.mubr.f32.gmra.mrb[0].mxu0 %v17
  %v134 = vpop.f32.mrb[0].mxu0
  %v135 = vadd.f32 %v51, %v134
  %v136 = vpop.f32.mrb[0].mxu0
  %137 = vmatprep.mubr.f32.mxu0 0.0
  %138 = vmatmul.mubr.f32.gmra.mrb[0].mxu0 %v18
  %v139 = vpop.f32.mrb[0].mxu0
  %v140 = vadd.f32 %v51, %v139
  %v141 = vpop.f32.mrb[0].mxu0
  %142 = vmatprep.mubr.f32.mxu0 0.0
  %143 = vmatmul.mubr.f32.gmra.mrb[0].mxu0 %v19
  %v144 = vpop.f32.mrb[0].mxu0
  %v145 = vadd.f32 %v51, %v144
  %v146 = vpop.f32.mrb[0].mxu0
  %147 = vmatprep.mubr.f32.mxu0 0.0
  %148 = vmatmul.mubr.f32.gmra.mrb[0].mxu0 %v20
  %v149 = vpop.f32.mrb[0].mxu0
  %v150 = vadd.f32 %v51, %v149
  %v151 = vpop.f32.mrb[0].mxu0
  %152 = vmatprep.mubr.f32.mxu0 0.0
  %153 = vmatmul.mubr.f32.gmra.mrb[0].mxu0 %v21
  %v154 = vpop.f32.mrb[0].mxu0
  %v155 = vadd.f32 %v51, %v154
  %v156 = vpop.f32.mrb[0].mxu0
  %157 = vmatprep.mubr.f32.mxu0 0.0
  %158 = vmatmul.mubr.f32.gmra.mrb[0].mxu0 %v22
  %v159 = vpop.f32.mrb[0].mxu0
  %v160 = vadd.f32 %v51, %v159
  %v161 = vpop.f32.mrb[0].mxu0
  %162 = vmatprep.mubr.f32.mxu0 0.0
  %163 = vmatmul.mubr.f32.gmra.mrb[0].mxu0 %v23
  %v164 = vpop.f32.mrb[0].mxu0
  %v165 = vadd.f32 %v51, %v164
  %v166 = vpop.f32.mrb[0].mxu0
  %167 = vmatprep.mubr.f32.mxu0 0.0
  %168 = vmatmul.mubr.f32.gmra.mrb[0].mxu0 %v24
  %v169 = vpop.f32.mrb[0].mxu0
  %v170 = vadd.f32 %v51, %v169
  %v171 = vpop.f32.mrb[0].mxu0
  %172 = vmatprep.mubr.f32.mxu0 0.0
  %173 = vmatmul.mubr.f32.gmra.mrb[0].mxu0 %v25
  %v174 = vpop.f32.mrb[0].mxu0
  %v175 = vadd.f32 %v51, %v174
  %v176 = vpop.f32.mrb[0].mxu0
  %177 = vmatprep.mubr.f32.mxu0 0.0
  %178 = vmatmul.mubr.f32.gmra.mrb[0].mxu0 %v26
  %v179 = vpop.f32.mrb[0].mxu0
  %v180 = vadd.f32 %v51, %v179
  %v181 = vpop.f32.mrb[0].mxu0
  %182 = vmatprep.mubr.f32.mxu0 0.0
  %183 = vmatmul.mubr.f32.gmra.mrb[0].mxu0 %v27
  %v184 = vpop.f32.mrb[0].mxu0
  %v185 = vadd.f32 %v51, %v184
  %v186 = vpop.f32.mrb[0].mxu0
  %187 = vmatprep.mubr.f32.mxu0 0.0
  %188 = vmatmul.mubr.f32.gmra.mrb[0].mxu0 %v28
  %v189 = vpop.f32.mrb[0].mxu0
  %v190 = vadd.f32 %v51, %v189
  %v191 = vpop.f32.mrb[0].mxu0
  %192 = vmatprep.mubr.f32.mxu0 0.0
  %193 = vmatmul.mubr.f32.gmra.mrb[0].mxu0 %v29
  %v194 = vpop.f32.mrb[0].mxu0
  %v195 = vadd.f32 %v51, %v194
  %v196 = vpop.f32.mrb[0].mxu0
  %197 = vdwg.mxu0
  %v198 = vlaneseq
  %v199 = vand.u32 %v198, 127
  %vm200 = vcmp.lt.s32.totalorder %v199, 8
  %v201 = vsel %vm200, %v120, -1e+30
  %v202 = vsel %vm200, %v125, -1e+30
  %v203 = vsel %vm200, %v130, -1e+30
  %v204 = vsel %vm200, %v135, -1e+30
  %v205 = vsel %vm200, %v140, -1e+30
  %v206 = vsel %vm200, %v145, -1e+30
  %v207 = vsel %vm200, %v150, -1e+30
  %v208 = vsel %vm200, %v155, -1e+30
  %v209 = vsel %vm200, %v160, -1e+30
  %v210 = vsel %vm200, %v165, -1e+30
  %v211 = vsel %vm200, %v170, -1e+30
  %v212 = vsel %vm200, %v175, -1e+30
  %v213 = vsel %vm200, %v180, -1e+30
  %v214 = vsel %vm200, %v185, -1e+30
  %v215 = vsel %vm200, %v190, -1e+30
  %v216 = vsel %vm200, %v195, -1e+30
  %217 = vmax.xlane.f32.xlu0 %v201
  %v218 = vpop.xlane.xlu0 %217
  %219 = vmax.xlane.f32.xlu0 %v202
  %v220 = vpop.xlane.xlu0 %219
  %221 = vmax.xlane.f32.xlu0 %v203
  %v222 = vpop.xlane.xlu0 %221
  %223 = vmax.xlane.f32.xlu0 %v204
  %v224 = vpop.xlane.xlu0 %223
  %225 = vmax.xlane.f32.xlu0 %v205
  %v226 = vpop.xlane.xlu0 %225
  %227 = vmax.xlane.f32.xlu0 %v206
  %v228 = vpop.xlane.xlu0 %227
  %229 = vmax.xlane.f32.xlu0 %v207
  %v230 = vpop.xlane.xlu0 %229
  %231 = vmax.xlane.f32.xlu0 %v208
  %v232 = vpop.xlane.xlu0 %231
  %233 = vmax.xlane.f32.xlu0 %v209
  %v234 = vpop.xlane.xlu0 %233
  %235 = vmax.xlane.f32.xlu0 %v210
  %v236 = vpop.xlane.xlu0 %235
  %237 = vmax.xlane.f32.xlu0 %v211
  %v238 = vpop.xlane.xlu0 %237
  %239 = vmax.xlane.f32.xlu0 %v212
  %v240 = vpop.xlane.xlu0 %239
  %241 = vmax.xlane.f32.xlu0 %v213
  %v242 = vpop.xlane.xlu0 %241
  %243 = vmax.xlane.f32.xlu0 %v214
  %v244 = vpop.xlane.xlu0 %243
  %245 = vmax.xlane.f32.xlu0 %v215
  %v246 = vpop.xlane.xlu0 %245
  %247 = vmax.xlane.f32.xlu0 %v216
  %v248 = vpop.xlane.xlu0 %247
  %v249 = vsub.f32 %v201, %v218
  %v250 = vsub.f32 %v202, %v220
  %v251 = vsub.f32 %v203, %v222
  %v252 = vsub.f32 %v204, %v224
  %v253 = vsub.f32 %v205, %v226
  %v254 = vsub.f32 %v206, %v228
  %v255 = vsub.f32 %v207, %v230
  %v256 = vsub.f32 %v208, %v232
  %v257 = vsub.f32 %v209, %v234
  %v258 = vsub.f32 %v210, %v236
  %v259 = vsub.f32 %v211, %v238
  %v260 = vsub.f32 %v212, %v240
  %v261 = vsub.f32 %v213, %v242
  %v262 = vsub.f32 %v214, %v244
  %v263 = vsub.f32 %v215, %v246
  %v264 = vsub.f32 %v216, %v248
  %v265 = vmul.f32 %v249, 1.442695
  %v266 = vpow.pop %v265
  %v267 = vmul.f32 %v250, 1.442695
  %v268 = vpow.pop %v267
  %v269 = vmul.f32 %v251, 1.442695
  %v270 = vpow.pop %v269
  %v271 = vmul.f32 %v252, 1.442695
  %v272 = vpow.pop %v271
  %v273 = vmul.f32 %v253, 1.442695
  %v274 = vpow.pop %v273
  %v275 = vmul.f32 %v254, 1.442695
  %v276 = vpow.pop %v275
  %v277 = vmul.f32 %v255, 1.442695
  %v278 = vpow.pop %v277
  %v279 = vmul.f32 %v256, 1.442695
  %v280 = vpow.pop %v279
  %v281 = vmul.f32 %v257, 1.442695
  %v282 = vpow.pop %v281
  %v283 = vmul.f32 %v258, 1.442695
  %v284 = vpow.pop %v283
  %v285 = vmul.f32 %v259, 1.442695
  %v286 = vpow.pop %v285
  %v287 = vmul.f32 %v260, 1.442695
  %v288 = vpow.pop %v287
  %v289 = vmul.f32 %v261, 1.442695
  %v290 = vpow.pop %v289
  %v291 = vmul.f32 %v262, 1.442695
  %v292 = vpow.pop %v291
  %v293 = vmul.f32 %v263, 1.442695
  %v294 = vpow.pop %v293
  %v295 = vmul.f32 %v264, 1.442695
  %v296 = vpow.pop %v295
  %297 = vadd.xlane.f32.xlu0 %v266
  %v298 = vpop.xlane.xlu0 %297
  %299 = vadd.xlane.f32.xlu0 %v268
  %v300 = vpop.xlane.xlu0 %299
  %301 = vadd.xlane.f32.xlu0 %v270
  %v302 = vpop.xlane.xlu0 %301
  %303 = vadd.xlane.f32.xlu0 %v272
  %v304 = vpop.xlane.xlu0 %303
  %305 = vadd.xlane.f32.xlu0 %v274
  %v306 = vpop.xlane.xlu0 %305
  %307 = vadd.xlane.f32.xlu0 %v276
  %v308 = vpop.xlane.xlu0 %307
  %309 = vadd.xlane.f32.xlu0 %v278
  %v310 = vpop.xlane.xlu0 %309
  %311 = vadd.xlane.f32.xlu0 %v280
  %v312 = vpop.xlane.xlu0 %311
  %313 = vadd.xlane.f32.xlu0 %v282
  %v314 = vpop.xlane.xlu0 %313
  %315 = vadd.xlane.f32.xlu0 %v284
  %v316 = vpop.xlane.xlu0 %315
  %317 = vadd.xlane.f32.xlu0 %v286
  %v318 = vpop.xlane.xlu0 %317
  %319 = vadd.xlane.f32.xlu0 %v288
  %v320 = vpop.xlane.xlu0 %319
  %321 = vadd.xlane.f32.xlu0 %v290
  %v322 = vpop.xlane.xlu0 %321
  %323 = vadd.xlane.f32.xlu0 %v292
  %v324 = vpop.xlane.xlu0 %323
  %325 = vadd.xlane.f32.xlu0 %v294
  %v326 = vpop.xlane.xlu0 %325
  %327 = vadd.xlane.f32.xlu0 %v296
  %v328 = vpop.xlane.xlu0 %327
  %v329 = vrcp.pop %v298
  %v330 = vrcp.pop %v300
  %v331 = vrcp.pop %v302
  %v332 = vrcp.pop %v304
  %v333 = vrcp.pop %v306
  %v334 = vrcp.pop %v308
  %v335 = vrcp.pop %v310
  %v336 = vrcp.pop %v312
  %v337 = vrcp.pop %v314
  %v338 = vrcp.pop %v316
  %v339 = vrcp.pop %v318
  %v340 = vrcp.pop %v320
  %v341 = vrcp.pop %v322
  %v342 = vrcp.pop %v324
  %v343 = vrcp.pop %v326
  %v344 = vrcp.pop %v328
  %v345 = vmul.f32 %v266, %v329
  %v346 = vmul.f32 %v268, %v330
  %v347 = vmul.f32 %v270, %v331
  %v348 = vmul.f32 %v272, %v332
  %v349 = vmul.f32 %v274, %v333
  %v350 = vmul.f32 %v276, %v334
  %v351 = vmul.f32 %v278, %v335
  %v352 = vmul.f32 %v280, %v336
  %v353 = vmul.f32 %v282, %v337
  %v354 = vmul.f32 %v284, %v338
  %v355 = vmul.f32 %v286, %v339
  %v356 = vmul.f32 %v288, %v340
  %v357 = vmul.f32 %v290, %v341
  %v358 = vmul.f32 %v292, %v342
  %v359 = vmul.f32 %v294, %v343
  %v360 = vmul.f32 %v296, %v344
  %361 = vst [vmem:[%s3] sm:$0xff] %v345
  %362 = vst [vmem:[%s3 + $0x8] sm:$0xff] %v346
  %363 = vst [vmem:[%s3 + $0x10] sm:$0xff] %v347
  %364 = vst [vmem:[%s3 + $0x18] sm:$0xff] %v348
  %365 = vst [vmem:[%s3 + $0x20] sm:$0xff] %v349
  %366 = vst [vmem:[%s3 + $0x28] sm:$0xff] %v350
  %367 = vst [vmem:[%s3 + $0x30] sm:$0xff] %v351
  %368 = vst [vmem:[%s3 + $0x38] sm:$0xff] %v352
  %369 = vst [vmem:[%s3 + $0x40] sm:$0xff] %v353
  %370 = vst [vmem:[%s3 + $0x48] sm:$0xff] %v354
  %371 = vst [vmem:[%s3 + $0x50] sm:$0xff] %v355
  %372 = vst [vmem:[%s3 + $0x58] sm:$0xff] %v356
  %373 = vst [vmem:[%s3 + $0x60] sm:$0xff] %v357
  %374 = vst [vmem:[%s3 + $0x68] sm:$0xff] %v358
  %375 = vst [vmem:[%s3 + $0x70] sm:$0xff] %v359
  %376 = vst [vmem:[%s3 + $0x78] sm:$0xff] %v360
  // Predicated region
  $region14: #{graphsage_forward.21} parent=0 // pred_check
    _
  $region15: #{graphsage_forward.21} parent=0 // pred_check_branch
    %378 = sbr.rel (0) target = $region17
  $region16: #{graphsage_forward.21} parent=0 // pred_region
    _
  $region17: #{graphsage_forward.21} parent=0 // pred_fallthru
    _
  // Predicated region
  $region18: #{graphsage_forward.21} parent=0 // pred_check
    _
  $region19: #{graphsage_forward.21} parent=0 // pred_check_branch
    %380 = sbr.rel (0) target = $region21
  $region20: #{graphsage_forward.21} parent=0 // pred_region
    _
  $region21: #{graphsage_forward.21} parent=0 // pred_fallthru
    _

// kernel: graphsage_forward.14
$region0: #{graphsage_forward.14}
  #allocation0 [shape = 'u32[]', space=smem, size = 0x4, offset = 0x4, fixed_abs, tag = 'smem constant byte address 0x4 - core index']
  #allocation1 [shape = 'u32[144,128]{1,0:T(1,128)}', space=vmem, size = 0x12000, scoped, tag = 'internal scratch']
  %s0 = inlined_call_operand.vmem [shape: f32[128,128], index: 0, kind: input, shape index: {}]
  %s1 = inlined_call_operand.vmem [shape: f32[1,128], index: 1, kind: input, shape index: {}]
  %s2 = inlined_call_operand.vmem [shape: f32[1,128], index: 2, kind: input, shape index: {}]
  %s3 = inlined_call_operand.vmem [shape: f32[1,128], index: 3, kind: input, shape index: {}]
  %s4 = inlined_call_operand.vmem [shape: f32[1,128], index: 4, kind: input, shape index: {}]
  %s5 = inlined_call_operand.vmem [shape: f32[128,128], index: 5, kind: output, shape index: {}]
  %s6 = sld [smem:[#allocation0]]
  $region30: #{graphsage_forward.14} parent=0
    _
  %s8 = ssub.s32 1, %s6
  %s9 = scalar_select 0, %s8, %s6
  // Predicated region
  $region2: #{graphsage_forward.14} parent=0 // pred_check
    _
  $region3: #{graphsage_forward.14} parent=0 // pred_check_branch
    %11 = sbr.rel (0) target = $region5
  $region4: #{graphsage_forward.14} parent=0 // pred_region
    _
  $region5: #{graphsage_forward.14} parent=0 // pred_fallthru
    _
  // Predicated region
  $region6: #{graphsage_forward.14} parent=0 // pred_check
    _
  $region7: #{graphsage_forward.14} parent=0 // pred_check_branch
    %13 = sbr.rel (0) target = $region9
  $region8: #{graphsage_forward.14} parent=0 // pred_region
    _
  $region9: #{graphsage_forward.14} parent=0 // pred_fallthru
    _
  // Predicated region
  $region10: #{graphsage_forward.14} parent=0 // pred_check
    _
  $region11: #{graphsage_forward.14} parent=0 // pred_check_branch
    %15 = sbr.rel (0) target = $region13
  $region12: #{graphsage_forward.14} parent=0 // pred_region
    _
  $region13: #{graphsage_forward.14} parent=0 // pred_fallthru
    _
  // Predicated region
  $region14: #{graphsage_forward.14} parent=0 // pred_check
    _
  $region15: #{graphsage_forward.14} parent=0 // pred_check_branch
    %17 = sbr.rel (0) target = $region17
  $region16: #{graphsage_forward.14} parent=0 // pred_region
    _
  $region17: #{graphsage_forward.14} parent=0 // pred_fallthru
    _
  // Predicated region
  $region18: #{graphsage_forward.14} parent=0 // pred_check
    _
  $region19: #{graphsage_forward.14} parent=0 // pred_check_branch
    %19 = sbr.rel (0) target = $region21
  $region20: #{graphsage_forward.14} parent=0 // pred_region
    _
  $region21: #{graphsage_forward.14} parent=0 // pred_fallthru
    _
  %v20 = vld [vmem:[%s1] sm:$0x1]
  %v21 = vmul.f32 %v20, 0.015625
  %v22 = vld [vmem:[%s2] sm:$0x1]
  %v23 = vmul.f32 %v22, 0.015625
  %v24 = vmul.f32 %v21, %v21
  %v25 = vsub.f32 %v23, %v24
  %v26 = vld [vmem:[%s0] sm:$0xff]
  %v27 = vld [vmem:[%s0 + $0x8] sm:$0xff]
  %v28 = vld [vmem:[%s0 + $0x10] sm:$0xff]
  %v29 = vld [vmem:[%s0 + $0x18] sm:$0xff]
  %v30 = vld [vmem:[%s0 + $0x20] sm:$0xff]
  %v31 = vld [vmem:[%s0 + $0x28] sm:$0xff]
  %v32 = vld [vmem:[%s0 + $0x30] sm:$0xff]
  %v33 = vld [vmem:[%s0 + $0x38] sm:$0xff]
  %v34 = vld [vmem:[%s0 + $0x40] sm:$0xff]
  %v35 = vld [vmem:[%s0 + $0x48] sm:$0xff]
  %v36 = vld [vmem:[%s0 + $0x50] sm:$0xff]
  %v37 = vld [vmem:[%s0 + $0x58] sm:$0xff]
  %v38 = vld [vmem:[%s0 + $0x60] sm:$0xff]
  %v39 = vld [vmem:[%s0 + $0x68] sm:$0xff]
  %v40 = vld [vmem:[%s0 + $0x70] sm:$0xff]
  %v41 = vld [vmem:[%s0 + $0x78] sm:$0xff]
  %v43 = vlaneseq
  %v44 = vshrl.u32 %v43, 7
  %v45 = vsub.s32 0, %v44
  %v46 = vrot.slane %v21, %v45
  %v48 = vsub.f32 %v26, %v46
  %v49 = vsub.f32 %v27, %v46
  %v50 = vsub.f32 %v28, %v46
  %v51 = vsub.f32 %v29, %v46
  %v52 = vsub.f32 %v30, %v46
  %v53 = vsub.f32 %v31, %v46
  %v54 = vsub.f32 %v32, %v46
  %v55 = vsub.f32 %v33, %v46
  %v56 = vsub.f32 %v34, %v46
  %v57 = vsub.f32 %v35, %v46
  %v58 = vsub.f32 %v36, %v46
  %v59 = vsub.f32 %v37, %v46
  %v60 = vsub.f32 %v38, %v46
  %v61 = vsub.f32 %v39, %v46
  %v62 = vsub.f32 %v40, %v46
  %v63 = vsub.f32 %v41, %v46
  %v64 = vadd.f32 %v25, 1e-05
  %v65 = vrsqrt.pop %v64
  %v67 = vlaneseq
  %v68 = vshrl.u32 %v67, 7
  %v69 = vsub.s32 0, %v68
  %v70 = vrot.slane %v65, %v69
  %v72 = vmul.f32 %v48, %v70
  %v73 = vmul.f32 %v49, %v70
  %v74 = vmul.f32 %v50, %v70
  %v75 = vmul.f32 %v51, %v70
  %v76 = vmul.f32 %v52, %v70
  %v77 = vmul.f32 %v53, %v70
  %v78 = vmul.f32 %v54, %v70
  %v79 = vmul.f32 %v55, %v70
  %v80 = vmul.f32 %v56, %v70
  %v81 = vmul.f32 %v57, %v70
  %v82 = vmul.f32 %v58, %v70
  %v83 = vmul.f32 %v59, %v70
  %v84 = vmul.f32 %v60, %v70
  %v85 = vmul.f32 %v61, %v70
  %v86 = vmul.f32 %v62, %v70
  %v87 = vmul.f32 %v63, %v70
  %v88 = vld [vmem:[%s3] sm:$0x1]
  %v90 = vlaneseq
  %v91 = vshrl.u32 %v90, 7
  %v92 = vsub.s32 0, %v91
  %v93 = vrot.slane %v88, %v92
  %v95 = vmul.f32 %v72, %v93
  %v96 = vmul.f32 %v73, %v93
  %v97 = vmul.f32 %v74, %v93
  %v98 = vmul.f32 %v75, %v93
  %v99 = vmul.f32 %v76, %v93
  %v100 = vmul.f32 %v77, %v93
  %v101 = vmul.f32 %v78, %v93
  %v102 = vmul.f32 %v79, %v93
  %v103 = vmul.f32 %v80, %v93
  %v104 = vmul.f32 %v81, %v93
  %v105 = vmul.f32 %v82, %v93
  %v106 = vmul.f32 %v83, %v93
  %v107 = vmul.f32 %v84, %v93
  %v108 = vmul.f32 %v85, %v93
  %v109 = vmul.f32 %v86, %v93
  %v110 = vmul.f32 %v87, %v93
  %v111 = vld [vmem:[%s4] sm:$0x1]
  %v113 = vlaneseq
  %v114 = vshrl.u32 %v113, 7
  %v115 = vsub.s32 0, %v114
  %v116 = vrot.slane %v111, %v115
  %v118 = vadd.f32 %v95, %v116
  %v119 = vadd.f32 %v96, %v116
  %v120 = vadd.f32 %v97, %v116
  %v121 = vadd.f32 %v98, %v116
  %v122 = vadd.f32 %v99, %v116
  %v123 = vadd.f32 %v100, %v116
  %v124 = vadd.f32 %v101, %v116
  %v125 = vadd.f32 %v102, %v116
  %v126 = vadd.f32 %v103, %v116
  %v127 = vadd.f32 %v104, %v116
  %v128 = vadd.f32 %v105, %v116
  %v129 = vadd.f32 %v106, %v116
  %v130 = vadd.f32 %v107, %v116
  %v131 = vadd.f32 %v108, %v116
  %v132 = vadd.f32 %v109, %v116
  %v133 = vadd.f32 %v110, %v116
  %v134 = vmax.f32 %v118, 0.0
  %v135 = vmax.f32 %v119, 0.0
  %v136 = vmax.f32 %v120, 0.0
  %v137 = vmax.f32 %v121, 0.0
  %v138 = vmax.f32 %v122, 0.0
  %v139 = vmax.f32 %v123, 0.0
  %v140 = vmax.f32 %v124, 0.0
  %v141 = vmax.f32 %v125, 0.0
  %v142 = vmax.f32 %v126, 0.0
  %v143 = vmax.f32 %v127, 0.0
  %v144 = vmax.f32 %v128, 0.0
  %v145 = vmax.f32 %v129, 0.0
  %v146 = vmax.f32 %v130, 0.0
  %v147 = vmax.f32 %v131, 0.0
  %v148 = vmax.f32 %v132, 0.0
  %v149 = vmax.f32 %v133, 0.0
  %150 = vst [vmem:[%s5] sm:$0xff] %v134
  %151 = vst [vmem:[%s5 + $0x8] sm:$0xff] %v135
  %152 = vst [vmem:[%s5 + $0x10] sm:$0xff] %v136
  %153 = vst [vmem:[%s5 + $0x18] sm:$0xff] %v137
  %154 = vst [vmem:[%s5 + $0x20] sm:$0xff] %v138
  %155 = vst [vmem:[%s5 + $0x28] sm:$0xff] %v139
  %156 = vst [vmem:[%s5 + $0x30] sm:$0xff] %v140
  %157 = vst [vmem:[%s5 + $0x38] sm:$0xff] %v141
  %158 = vst [vmem:[%s5 + $0x40] sm:$0xff] %v142
  %159 = vst [vmem:[%s5 + $0x48] sm:$0xff] %v143
  %160 = vst [vmem:[%s5 + $0x50] sm:$0xff] %v144
  %161 = vst [vmem:[%s5 + $0x58] sm:$0xff] %v145
  %162 = vst [vmem:[%s5 + $0x60] sm:$0xff] %v146
  %163 = vst [vmem:[%s5 + $0x68] sm:$0xff] %v147
  %164 = vst [vmem:[%s5 + $0x70] sm:$0xff] %v148
  %165 = vst [vmem:[%s5 + $0x78] sm:$0xff] %v149
  // Predicated region
  $region22: #{graphsage_forward.14} parent=0 // pred_check
    _
  $region23: #{graphsage_forward.14} parent=0 // pred_check_branch
    %167 = sbr.rel (0) target = $region25
  $region24: #{graphsage_forward.14} parent=0 // pred_region
    _
  $region25: #{graphsage_forward.14} parent=0 // pred_fallthru
    _
  // Predicated region
  $region26: #{graphsage_forward.14} parent=0 // pred_check
    _
  $region27: #{graphsage_forward.14} parent=0 // pred_check_branch
    %169 = sbr.rel (0) target = $region29
  $region28: #{graphsage_forward.14} parent=0 // pred_region
    _
  $region29: #{graphsage_forward.14} parent=0 // pred_fallthru
    _

// kernel: graphsage_forward.12
$region0: #{graphsage_forward.12}
  #allocation0 [shape = 'u32[]', space=smem, size = 0x4, offset = 0x4, fixed_abs, tag = 'smem constant byte address 0x4 - core index']
  #allocation1 [shape = 'u32[144,128]{1,0:T(1,128)}', space=vmem, size = 0x12000, scoped, tag = 'internal scratch']
  #allocation2 [shape = 'f32[128,128]{1,0:T(8,128)}', space=vmem, size = 0x10000, scoped, tag = 'scratch operand']
  %s0 = inlined_call_operand.vmem [shape: bf16[128,128], index: 0, kind: input, shape index: {}]
  %s1 = inlined_call_operand.vmem [shape: f32[128,128], index: 1, kind: input, shape index: {}, may-alias: {1,2}]
  %s2 = inlined_call_operand.vmem [shape: f32[128,128], index: 2, kind: input, shape index: {}, may-alias: {1,2}]
  %s3 = inlined_call_operand.vmem [shape: f32[256,128], index: 3, kind: input, shape index: {}]
  %s4 = inlined_call_operand.vmem [shape: f32[1,128], index: 4, kind: input, shape index: {}]
  %s5 = inlined_call_operand.vmem [shape: f32[128,128], index: 5, kind: output, shape index: {}]
  %s6 = sld [smem:[#allocation0]]
  $region38: #{graphsage_forward.12} parent=0
    _
  %s8 = ssub.s32 1, %s6
  %s9 = scalar_select 0, %s8, %s6
  // Predicated region
  $region2: #{graphsage_forward.12} parent=0 // pred_check
    _
  $region3: #{graphsage_forward.12} parent=0 // pred_check_branch
    %11 = sbr.rel (0) target = $region5
  $region4: #{graphsage_forward.12} parent=0 // pred_region
    _
  $region5: #{graphsage_forward.12} parent=0 // pred_fallthru
    _
  // Predicated region
  $region6: #{graphsage_forward.12} parent=0 // pred_check
    _
  $region7: #{graphsage_forward.12} parent=0 // pred_check_branch
    %13 = sbr.rel (0) target = $region9
  $region8: #{graphsage_forward.12} parent=0 // pred_region
    _
  $region9: #{graphsage_forward.12} parent=0 // pred_fallthru
    _
  // Predicated region
  $region10: #{graphsage_forward.12} parent=0 // pred_check
    _
  $region11: #{graphsage_forward.12} parent=0 // pred_check_branch
    %15 = sbr.rel (0) target = $region13
  $region12: #{graphsage_forward.12} parent=0 // pred_region
    _
  $region13: #{graphsage_forward.12} parent=0 // pred_fallthru
    _
  // Predicated region
  $region14: #{graphsage_forward.12} parent=0 // pred_check
    _
  $region15: #{graphsage_forward.12} parent=0 // pred_check_branch
    %17 = sbr.rel (0) target = $region17
  $region16: #{graphsage_forward.12} parent=0 // pred_region
    _
  $region17: #{graphsage_forward.12} parent=0 // pred_fallthru
    _
  // Predicated region
  $region18: #{graphsage_forward.12} parent=0 // pred_check
    _
  $region19: #{graphsage_forward.12} parent=0 // pred_check_branch
    %19 = sbr.rel (0) target = $region21
  $region20: #{graphsage_forward.12} parent=0 // pred_region
    _
  $region21: #{graphsage_forward.12} parent=0 // pred_fallthru
    _
  %p21 = scmp.eq.s32.totalorder 0, 0
  // Predicated region
  $region22: #{graphsage_forward.12} parent=0 // pred_check
    %p22 = pneg %p21
  $region23: #{graphsage_forward.12} parent=0 // pred_check_branch
    %24 = sbr.rel (%p22) target = $region25
  $region24: #{graphsage_forward.12} parent=0 // pred_region
    %25 = vst [vmem:[#allocation2] sm:$0xff] 0.0
    %26 = vst [vmem:[#allocation2 + $0x8] sm:$0xff] 0.0
    %27 = vst [vmem:[#allocation2 + $0x10] sm:$0xff] 0.0
    %28 = vst [vmem:[#allocation2 + $0x18] sm:$0xff] 0.0
    %29 = vst [vmem:[#allocation2 + $0x20] sm:$0xff] 0.0
    %30 = vst [vmem:[#allocation2 + $0x28] sm:$0xff] 0.0
    %31 = vst [vmem:[#allocation2 + $0x30] sm:$0xff] 0.0
    %32 = vst [vmem:[#allocation2 + $0x38] sm:$0xff] 0.0
    %33 = vst [vmem:[#allocation2 + $0x40] sm:$0xff] 0.0
    %34 = vst [vmem:[#allocation2 + $0x48] sm:$0xff] 0.0
    %35 = vst [vmem:[#allocation2 + $0x50] sm:$0xff] 0.0
    %36 = vst [vmem:[#allocation2 + $0x58] sm:$0xff] 0.0
    %37 = vst [vmem:[#allocation2 + $0x60] sm:$0xff] 0.0
    %38 = vst [vmem:[#allocation2 + $0x68] sm:$0xff] 0.0
    %39 = vst [vmem:[#allocation2 + $0x70] sm:$0xff] 0.0
    %40 = vst [vmem:[#allocation2 + $0x78] sm:$0xff] 0.0
  $region25: #{graphsage_forward.12} parent=0 // pred_fallthru
    _
  %v41 = vld [vmem:[#allocation2] sm:$0xff]
  %v42 = vld [vmem:[#allocation2 + $0x8] sm:$0xff]
  %v43 = vld [vmem:[#allocation2 + $0x10] sm:$0xff]
  %v44 = vld [vmem:[#allocation2 + $0x18] sm:$0xff]
  %v45 = vld [vmem:[#allocation2 + $0x20] sm:$0xff]
  %v46 = vld [vmem:[#allocation2 + $0x28] sm:$0xff]
  %v47 = vld [vmem:[#allocation2 + $0x30] sm:$0xff]
  %v48 = vld [vmem:[#allocation2 + $0x38] sm:$0xff]
  %v49 = vld [vmem:[#allocation2 + $0x40] sm:$0xff]
  %v50 = vld [vmem:[#allocation2 + $0x48] sm:$0xff]
  %v51 = vld [vmem:[#allocation2 + $0x50] sm:$0xff]
  %v52 = vld [vmem:[#allocation2 + $0x58] sm:$0xff]
  %v53 = vld [vmem:[#allocation2 + $0x60] sm:$0xff]
  %v54 = vld [vmem:[#allocation2 + $0x68] sm:$0xff]
  %v55 = vld [vmem:[#allocation2 + $0x70] sm:$0xff]
  %v56 = vld [vmem:[#allocation2 + $0x78] sm:$0xff]
  %v57 = vld [vmem:[%s0] sm:$0xf]
  %v58 = vld [vmem:[%s0 + $0x4] sm:$0xf]
  %v59 = vld [vmem:[%s0 + $0x8] sm:$0xf]
  %v60 = vld [vmem:[%s0 + $0xc] sm:$0xf]
  %v61 = vld [vmem:[%s0 + $0x10] sm:$0xf]
  %v62 = vld [vmem:[%s0 + $0x14] sm:$0xf]
  %v63 = vld [vmem:[%s0 + $0x18] sm:$0xf]
  %v64 = vld [vmem:[%s0 + $0x1c] sm:$0xf]
  %v65 = vld [vmem:[%s0 + $0x20] sm:$0xf]
  %v66 = vld [vmem:[%s0 + $0x24] sm:$0xf]
  %v67 = vld [vmem:[%s0 + $0x28] sm:$0xf]
  %v68 = vld [vmem:[%s0 + $0x2c] sm:$0xf]
  %v69 = vld [vmem:[%s0 + $0x30] sm:$0xf]
  %v70 = vld [vmem:[%s0 + $0x34] sm:$0xf]
  %v71 = vld [vmem:[%s0 + $0x38] sm:$0xf]
  %v72 = vld [vmem:[%s0 + $0x3c] sm:$0xf]
  %v73 = vld [vmem:[%s1] sm:$0xff]
  %v74 = vld [vmem:[%s1 + $0x8] sm:$0xff]
  %v75 = vld [vmem:[%s1 + $0x10] sm:$0xff]
  %v76 = vld [vmem:[%s1 + $0x18] sm:$0xff]
  %v77 = vld [vmem:[%s1 + $0x20] sm:$0xff]
  %v78 = vld [vmem:[%s1 + $0x28] sm:$0xff]
  %v79 = vld [vmem:[%s1 + $0x30] sm:$0xff]
  %v80 = vld [vmem:[%s1 + $0x38] sm:$0xff]
  %v81 = vld [vmem:[%s1 + $0x40] sm:$0xff]
  %v82 = vld [vmem:[%s1 + $0x48] sm:$0xff]
  %v83 = vld [vmem:[%s1 + $0x50] sm:$0xff]
  %v84 = vld [vmem:[%s1 + $0x58] sm:$0xff]
  %v85 = vld [vmem:[%s1 + $0x60] sm:$0xff]
  %v86 = vld [vmem:[%s1 + $0x68] sm:$0xff]
  %v87 = vld [vmem:[%s1 + $0x70] sm:$0xff]
  %v88 = vld [vmem:[%s1 + $0x78] sm:$0xff]
  %v89 = vpack.c.bf16 %v74, %v73
  %v90 = vpack.c.bf16 %v76, %v75
  %v91 = vpack.c.bf16 %v78, %v77
  %v92 = vpack.c.bf16 %v80, %v79
  %v93 = vpack.c.bf16 %v82, %v81
  %v94 = vpack.c.bf16 %v84, %v83
  %v95 = vpack.c.bf16 %v86, %v85
  %v96 = vpack.c.bf16 %v88, %v87
  %v113 = vunpack.c.l.b16 %v57
  %v114 = vunpack.c.l.b16 %v58
  %v115 = vunpack.c.l.b16 %v59
  %v116 = vunpack.c.l.b16 %v60
  %v117 = vunpack.c.l.b16 %v61
  %v118 = vunpack.c.l.b16 %v62
  %v119 = vunpack.c.l.b16 %v63
  %v120 = vunpack.c.l.b16 %v64
  %v121 = vunpack.c.l.b16 %v65
  %v122 = vunpack.c.l.b16 %v66
  %v123 = vunpack.c.l.b16 %v67
  %v124 = vunpack.c.l.b16 %v68
  %v125 = vunpack.c.l.b16 %v69
  %v126 = vunpack.c.l.b16 %v70
  %v127 = vunpack.c.l.b16 %v71
  %v128 = vunpack.c.l.b16 %v72
  %v129 = vpack.c.b16 %v114, %v113
  %v130 = vpack.c.b16 %v116, %v115
  %v131 = vpack.c.b16 %v118, %v117
  %v132 = vpack.c.b16 %v120, %v119
  %v133 = vpack.c.b16 %v122, %v121
  %v134 = vpack.c.b16 %v124, %v123
  %v135 = vpack.c.b16 %v126, %v125
  %v136 = vpack.c.b16 %v128, %v127
  %145 = vmatprep.subr.bf16.mxu0 0
  %146 = vmatpush1.bf16.msra.mxu0 %v89
  %147 = vmatprep.subr.bf16.mxu0 0
  %148 = vmatpush1.bf16.msra.mxu0 %v90
  %149 = vmatprep.subr.bf16.mxu0 0
  %150 = vmatpush1.bf16.msra.mxu0 %v91
  %151 = vmatprep.subr.bf16.mxu0 0
  %152 = vmatpush1.bf16.msra.mxu0 %v92
  %153 = vmatprep.subr.bf16.mxu0 0
  %154 = vmatpush1.bf16.msra.mxu0 %v93
  %155 = vmatprep.subr.bf16.mxu0 0
  %156 = vmatpush1.bf16.msra.mxu0 %v94
  %157 = vmatprep.subr.bf16.mxu0 0
  %158 = vmatpush1.bf16.msra.mxu0 %v95
  %159 = vmatprep.subr.bf16.mxu0 0
  %160 = vmatpush1.bf16.msra.mxu0 %v96
  %161 = vmatprep.subr.bf16.mxu0 0
  %162 = vmatpush1.bf16.msra.mxu0 0
  %163 = vmatprep.subr.bf16.mxu0 0
  %164 = vmatpush1.bf16.msra.mxu0 0
  %165 = vmatprep.subr.bf16.mxu0 0
  %166 = vmatpush1.bf16.msra.mxu0 0
  %167 = vmatprep.subr.bf16.mxu0 0
  %168 = vmatpush1.bf16.msra.mxu0 0
  %169 = vmatprep.subr.bf16.mxu0 0
  %170 = vmatpush1.bf16.msra.mxu0 0
  %171 = vmatprep.subr.bf16.mxu0 0
  %172 = vmatpush1.bf16.msra.mxu0 0
  %173 = vmatprep.subr.bf16.mxu0 0
  %174 = vmatpush1.bf16.msra.mxu0 0
  %175 = vmatprep.subr.bf16.mxu0 0
  %176 = vmatpush1.bf16.msra.mxu0 0
  %177 = vmatprep.mubr.bf16.mxu0 0
  %178 = vmatmul.mubr.bf16.gmra.mrb[0].mxu0 %v129
  %v179 = vpop.f32.mrb[0].mxu0
  %v180 = vadd.f32 0.0, %v179
  %v181 = vpop.f32.mrb[0].mxu0
  %v182 = vpop.f32.mrb[0].mxu0
  %v183 = vadd.f32 0.0, %v182
  %v184 = vpop.f32.mrb[0].mxu0
  %185 = vmatprep.mubr.bf16.mxu0 0
  %186 = vmatmul.mubr.bf16.gmra.mrb[0].mxu0 %v130
  %v187 = vpop.f32.mrb[0].mxu0
  %v188 = vadd.f32 0.0, %v187
  %v189 = vpop.f32.mrb[0].mxu0
  %v190 = vpop.f32.mrb[0].mxu0
  %v191 = vadd.f32 0.0, %v190
  %v192 = vpop.f32.mrb[0].mxu0
  %193 = vmatprep.mubr.bf16.mxu0 0
  %194 = vmatmul.mubr.bf16.gmra.mrb[0].mxu0 %v131
  %v195 = vpop.f32.mrb[0].mxu0
  %v196 = vadd.f32 0.0, %v195
  %v197 = vpop.f32.mrb[0].mxu0
  %v198 = vpop.f32.mrb[0].mxu0
  %v199 = vadd.f32 0.0, %v198
  %v200 = vpop.f32.mrb[0].mxu0
  %201 = vmatprep.mubr.bf16.mxu0 0
  %202 = vmatmul.mubr.bf16.gmra.mrb[0].mxu0 %v132
  %v203 = vpop.f32.mrb[0].mxu0
  %v204 = vadd.f32 0.0, %v203
  %v205 = vpop.f32.mrb[0].mxu0
  %v206 = vpop.f32.mrb[0].mxu0
  %v207 = vadd.f32 0.0, %v206
  %v208 = vpop.f32.mrb[0].mxu0
  %209 = vmatprep.mubr.bf16.mxu0 0
  %210 = vmatmul.mubr.bf16.gmra.mrb[0].mxu0 %v133
  %v211 = vpop.f32.mrb[0].mxu0
  %v212 = vadd.f32 0.0, %v211
  %v213 = vpop.f32.mrb[0].mxu0
  %v214 = vpop.f32.mrb[0].mxu0
  %v215 = vadd.f32 0.0, %v214
  %v216 = vpop.f32.mrb[0].mxu0
  %217 = vmatprep.mubr.bf16.mxu0 0
  %218 = vmatmul.mubr.bf16.gmra.mrb[0].mxu0 %v134
  %v219 = vpop.f32.mrb[0].mxu0
  %v220 = vadd.f32 0.0, %v219
  %v221 = vpop.f32.mrb[0].mxu0
  %v222 = vpop.f32.mrb[0].mxu0
  %v223 = vadd.f32 0.0, %v222
  %v224 = vpop.f32.mrb[0].mxu0
  %225 = vmatprep.mubr.bf16.mxu0 0
  %226 = vmatmul.mubr.bf16.gmra.mrb[0].mxu0 %v135
  %v227 = vpop.f32.mrb[0].mxu0
  %v228 = vadd.f32 0.0, %v227
  %v229 = vpop.f32.mrb[0].mxu0
  %v230 = vpop.f32.mrb[0].mxu0
  %v231 = vadd.f32 0.0, %v230
  %v232 = vpop.f32.mrb[0].mxu0
  %233 = vmatprep.mubr.bf16.mxu0 0
  %234 = vmatmul.mubr.bf16.gmra.mrb[0].mxu0 %v136
  %v235 = vpop.f32.mrb[0].mxu0
  %v236 = vadd.f32 0.0, %v235
  %v237 = vpop.f32.mrb[0].mxu0
  %v238 = vpop.f32.mrb[0].mxu0
  %v239 = vadd.f32 0.0, %v238
  %v240 = vpop.f32.mrb[0].mxu0
  %241 = vdwg.mxu0
  %v242 = vadd.f32 %v41, %v180
  %v243 = vadd.f32 %v42, %v183
  %v244 = vadd.f32 %v43, %v188
  %v245 = vadd.f32 %v44, %v191
  %v246 = vadd.f32 %v45, %v196
  %v247 = vadd.f32 %v46, %v199
  %v248 = vadd.f32 %v47, %v204
  %v249 = vadd.f32 %v48, %v207
  %v250 = vadd.f32 %v49, %v212
  %v251 = vadd.f32 %v50, %v215
  %v252 = vadd.f32 %v51, %v220
  %v253 = vadd.f32 %v52, %v223
  %v254 = vadd.f32 %v53, %v228
  %v255 = vadd.f32 %v54, %v231
  %v256 = vadd.f32 %v55, %v236
  %v257 = vadd.f32 %v56, %v239
  %258 = vst [vmem:[#allocation2] sm:$0xff] %v242
  %259 = vst [vmem:[#allocation2 + $0x8] sm:$0xff] %v243
  %260 = vst [vmem:[#allocation2 + $0x10] sm:$0xff] %v244
  %261 = vst [vmem:[#allocation2 + $0x18] sm:$0xff] %v245
  %262 = vst [vmem:[#allocation2 + $0x20] sm:$0xff] %v246
  %263 = vst [vmem:[#allocation2 + $0x28] sm:$0xff] %v247
  %264 = vst [vmem:[#allocation2 + $0x30] sm:$0xff] %v248
  %265 = vst [vmem:[#allocation2 + $0x38] sm:$0xff] %v249
  %266 = vst [vmem:[#allocation2 + $0x40] sm:$0xff] %v250
  %267 = vst [vmem:[#allocation2 + $0x48] sm:$0xff] %v251
  %268 = vst [vmem:[#allocation2 + $0x50] sm:$0xff] %v252
  %269 = vst [vmem:[#allocation2 + $0x58] sm:$0xff] %v253
  %270 = vst [vmem:[#allocation2 + $0x60] sm:$0xff] %v254
  %271 = vst [vmem:[#allocation2 + $0x68] sm:$0xff] %v255
  %272 = vst [vmem:[#allocation2 + $0x70] sm:$0xff] %v256
  %273 = vst [vmem:[#allocation2 + $0x78] sm:$0xff] %v257
  // Predicated region
  $region26: #{graphsage_forward.12} parent=0 // pred_check
    %p274 = pneg %p21
  $region27: #{graphsage_forward.12} parent=0 // pred_check_branch
    %276 = sbr.rel (%p274) target = $region29
  $region28: #{graphsage_forward.12} parent=0 // pred_region
    %v277 = vld [vmem:[#allocation2] sm:$0xff]
    %v278 = vld [vmem:[#allocation2 + $0x8] sm:$0xff]
    %v279 = vld [vmem:[#allocation2 + $0x10] sm:$0xff]
    %v280 = vld [vmem:[#allocation2 + $0x18] sm:$0xff]
    %v281 = vld [vmem:[#allocation2 + $0x20] sm:$0xff]
    %v282 = vld [vmem:[#allocation2 + $0x28] sm:$0xff]
    %v283 = vld [vmem:[#allocation2 + $0x30] sm:$0xff]
    %v284 = vld [vmem:[#allocation2 + $0x38] sm:$0xff]
    %v285 = vld [vmem:[#allocation2 + $0x40] sm:$0xff]
    %v286 = vld [vmem:[#allocation2 + $0x48] sm:$0xff]
    %v287 = vld [vmem:[#allocation2 + $0x50] sm:$0xff]
    %v288 = vld [vmem:[#allocation2 + $0x58] sm:$0xff]
    %v289 = vld [vmem:[#allocation2 + $0x60] sm:$0xff]
    %v290 = vld [vmem:[#allocation2 + $0x68] sm:$0xff]
    %v291 = vld [vmem:[#allocation2 + $0x70] sm:$0xff]
    %v292 = vld [vmem:[#allocation2 + $0x78] sm:$0xff]
    %v293 = vld [vmem:[%s2] sm:$0xff]
    %v294 = vld [vmem:[%s2 + $0x8] sm:$0xff]
    %v295 = vld [vmem:[%s2 + $0x10] sm:$0xff]
    %v296 = vld [vmem:[%s2 + $0x18] sm:$0xff]
    %v297 = vld [vmem:[%s2 + $0x20] sm:$0xff]
    %v298 = vld [vmem:[%s2 + $0x28] sm:$0xff]
    %v299 = vld [vmem:[%s2 + $0x30] sm:$0xff]
    %v300 = vld [vmem:[%s2 + $0x38] sm:$0xff]
    %v301 = vld [vmem:[%s2 + $0x40] sm:$0xff]
    %v302 = vld [vmem:[%s2 + $0x48] sm:$0xff]
    %v303 = vld [vmem:[%s2 + $0x50] sm:$0xff]
    %v304 = vld [vmem:[%s2 + $0x58] sm:$0xff]
    %v305 = vld [vmem:[%s2 + $0x60] sm:$0xff]
    %v306 = vld [vmem:[%s2 + $0x68] sm:$0xff]
    %v307 = vld [vmem:[%s2 + $0x70] sm:$0xff]
    %v308 = vld [vmem:[%s2 + $0x78] sm:$0xff]
    %v309 = vld [vmem:[%s3] sm:$0xff]
    %v310 = vld [vmem:[%s3 + $0x8] sm:$0xff]
    %v311 = vld [vmem:[%s3 + $0x10] sm:$0xff]
    %v312 = vld [vmem:[%s3 + $0x18] sm:$0xff]
    %v313 = vld [vmem:[%s3 + $0x20] sm:$0xff]
    %v314 = vld [vmem:[%s3 + $0x28] sm:$0xff]
    %v315 = vld [vmem:[%s3 + $0x30] sm:$0xff]
    %v316 = vld [vmem:[%s3 + $0x38] sm:$0xff]
    %v317 = vld [vmem:[%s3 + $0x40] sm:$0xff]
    %v318 = vld [vmem:[%s3 + $0x48] sm:$0xff]
    %v319 = vld [vmem:[%s3 + $0x50] sm:$0xff]
    %v320 = vld [vmem:[%s3 + $0x58] sm:$0xff]
    %v321 = vld [vmem:[%s3 + $0x60] sm:$0xff]
    %v322 = vld [vmem:[%s3 + $0x68] sm:$0xff]
    %v323 = vld [vmem:[%s3 + $0x70] sm:$0xff]
    %v324 = vld [vmem:[%s3 + $0x78] sm:$0xff]
    %v325 = vld [vmem:[%s3 + $0x80] sm:$0xff]
    %v326 = vld [vmem:[%s3 + $0x88] sm:$0xff]
    %v327 = vld [vmem:[%s3 + $0x90] sm:$0xff]
    %v328 = vld [vmem:[%s3 + $0x98] sm:$0xff]
    %v329 = vld [vmem:[%s3 + $0xa0] sm:$0xff]
    %v330 = vld [vmem:[%s3 + $0xa8] sm:$0xff]
    %v331 = vld [vmem:[%s3 + $0xb0] sm:$0xff]
    %v332 = vld [vmem:[%s3 + $0xb8] sm:$0xff]
    %v333 = vld [vmem:[%s3 + $0xc0] sm:$0xff]
    %v334 = vld [vmem:[%s3 + $0xc8] sm:$0xff]
    %v335 = vld [vmem:[%s3 + $0xd0] sm:$0xff]
    %v336 = vld [vmem:[%s3 + $0xd8] sm:$0xff]
    %v337 = vld [vmem:[%s3 + $0xe0] sm:$0xff]
    %v338 = vld [vmem:[%s3 + $0xe8] sm:$0xff]
    %v339 = vld [vmem:[%s3 + $0xf0] sm:$0xff]
    %v340 = vld [vmem:[%s3 + $0xf8] sm:$0xff]
    %v341 = vld [vmem:[%s4] sm:$0x1]
    %v343 = vlaneseq
    %v344 = vshrl.u32 %v343, 7
    %v345 = vsub.s32 0, %v344
    %v346 = vrot.slane %v341, %v345
    %348 = vmatprep.subr.mxu0 0.0
    %349 = vmatpush1.msra.mxu0 %v309
    %350 = vmatprep.subr.mxu0 0.0
    %351 = vmatpush1.msra.mxu0 %v310
    %352 = vmatprep.subr.mxu0 0.0
    %353 = vmatpush1.msra.mxu0 %v311
    %354 = vmatprep.subr.mxu0 0.0
    %355 = vmatpush1.msra.mxu0 %v312
    %356 = vmatprep.subr.mxu0 0.0
    %357 = vmatpush1.msra.mxu0 %v313
    %358 = vmatprep.subr.mxu0 0.0
    %359 = vmatpush1.msra.mxu0 %v314
    %360 = vmatprep.subr.mxu0 0.0
    %361 = vmatpush1.msra.mxu0 %v315
    %362 = vmatprep.subr.mxu0 0.0
    %363 = vmatpush1.msra.mxu0 %v316
    %364 = vmatprep.subr.mxu0 0.0
    %365 = vmatpush1.msra.mxu0 %v317
    %366 = vmatprep.subr.mxu0 0.0
    %367 = vmatpush1.msra.mxu0 %v318
    %368 = vmatprep.subr.mxu0 0.0
    %369 = vmatpush1.msra.mxu0 %v319
    %370 = vmatprep.subr.mxu0 0.0
    %371 = vmatpush1.msra.mxu0 %v320
    %372 = vmatprep.subr.mxu0 0.0
    %373 = vmatpush1.msra.mxu0 %v321
    %374 = vmatprep.subr.mxu0 0.0
    %375 = vmatpush1.msra.mxu0 %v322
    %376 = vmatprep.subr.mxu0 0.0
    %377 = vmatpush1.msra.mxu0 %v323
    %378 = vmatprep.subr.mxu0 0.0
    %379 = vmatpush1.msra.mxu0 %v324
    %380 = vmatprep.subr.mxu0 0.0
    %381 = vmatpush1.msra.mxu0 %v325
    %382 = vmatprep.subr.mxu0 0.0
    %383 = vmatpush1.msra.mxu0 %v326
    %384 = vmatprep.subr.mxu0 0.0
    %385 = vmatpush1.msra.mxu0 %v327
    %386 = vmatprep.subr.mxu0 0.0
    %387 = vmatpush1.msra.mxu0 %v328
    %388 = vmatprep.subr.mxu0 0.0
    %389 = vmatpush1.msra.mxu0 %v329
    %390 = vmatprep.subr.mxu0 0.0
    %391 = vmatpush1.msra.mxu0 %v330
    %392 = vmatprep.subr.mxu0 0.0
    %393 = vmatpush1.msra.mxu0 %v331
    %394 = vmatprep.subr.mxu0 0.0
    %395 = vmatpush1.msra.mxu0 %v332
    %396 = vmatprep.subr.mxu0 0.0
    %397 = vmatpush1.msra.mxu0 %v333
    %398 = vmatprep.subr.mxu0 0.0
    %399 = vmatpush1.msra.mxu0 %v334
    %400 = vmatprep.subr.mxu0 0.0
    %401 = vmatpush1.msra.mxu0 %v335
    %402 = vmatprep.subr.mxu0 0.0
    %403 = vmatpush1.msra.mxu0 %v336
    %404 = vmatprep.subr.mxu0 0.0
    %405 = vmatpush1.msra.mxu0 %v337
    %406 = vmatprep.subr.mxu0 0.0
    %407 = vmatpush1.msra.mxu0 %v338
    %408 = vmatprep.subr.mxu0 0.0
    %409 = vmatpush1.msra.mxu0 %v339
    %410 = vmatprep.subr.mxu0 0.0
    %411 = vmatpush1.msra.mxu0 %v340
    %412 = vmatprep.mubr.f32.mxu0 %v293
    %413 = vmatmul.mubr.f32.gmra.mrb[0].mxu0 %v277
    %v414 = vpop.f32.mrb[0].mxu0
    %v415 = vadd.f32 %v346, %v414
    %v416 = vpop.f32.mrb[0].mxu0
    %417 = vmatprep.mubr.f32.mxu0 %v294
    %418 = vmatmul.mubr.f32.gmra.mrb[0].mxu0 %v278
    %v419 = vpop.f32.mrb[0].mxu0
    %v420 = vadd.f32 %v346, %v419
    %v421 = vpop.f32.mrb[0].mxu0
    %422 = vmatprep.mubr.f32.mxu0 %v295
    %423 = vmatmul.mubr.f32.gmra.mrb[0].mxu0 %v279
    %v424 = vpop.f32.mrb[0].mxu0
    %v425 = vadd.f32 %v346, %v424
    %v426 = vpop.f32.mrb[0].mxu0
    %427 = vmatprep.mubr.f32.mxu0 %v296
    %428 = vmatmul.mubr.f32.gmra.mrb[0].mxu0 %v280
    %v429 = vpop.f32.mrb[0].mxu0
    %v430 = vadd.f32 %v346, %v429
    %v431 = vpop.f32.mrb[0].mxu0
    %432 = vmatprep.mubr.f32.mxu0 %v297
    %433 = vmatmul.mubr.f32.gmra.mrb[0].mxu0 %v281
    %v434 = vpop.f32.mrb[0].mxu0
    %v435 = vadd.f32 %v346, %v434
    %v436 = vpop.f32.mrb[0].mxu0
    %437 = vmatprep.mubr.f32.mxu0 %v298
    %438 = vmatmul.mubr.f32.gmra.mrb[0].mxu0 %v282
    %v439 = vpop.f32.mrb[0].mxu0
    %v440 = vadd.f32 %v346, %v439
    %v441 = vpop.f32.mrb[0].mxu0
    %442 = vmatprep.mubr.f32.mxu0 %v299
    %443 = vmatmul.mubr.f32.gmra.mrb[0].mxu0 %v283
    %v444 = vpop.f32.mrb[0].mxu0
    %v445 = vadd.f32 %v346, %v444
    %v446 = vpop.f32.mrb[0].mxu0
    %447 = vmatprep.mubr.f32.mxu0 %v300
    %448 = vmatmul.mubr.f32.gmra.mrb[0].mxu0 %v284
    %v449 = vpop.f32.mrb[0].mxu0
    %v450 = vadd.f32 %v346, %v449
    %v451 = vpop.f32.mrb[0].mxu0
    %452 = vmatprep.mubr.f32.mxu0 %v301
    %453 = vmatmul.mubr.f32.gmra.mrb[0].mxu0 %v285
    %v454 = vpop.f32.mrb[0].mxu0
    %v455 = vadd.f32 %v346, %v454
    %v456 = vpop.f32.mrb[0].mxu0
    %457 = vmatprep.mubr.f32.mxu0 %v302
    %458 = vmatmul.mubr.f32.gmra.mrb[0].mxu0 %v286
    %v459 = vpop.f32.mrb[0].mxu0
    %v460 = vadd.f32 %v346, %v459
    %v461 = vpop.f32.mrb[0].mxu0
    %462 = vmatprep.mubr.f32.mxu0 %v303
    %463 = vmatmul.mubr.f32.gmra.mrb[0].mxu0 %v287
    %v464 = vpop.f32.mrb[0].mxu0
    %v465 = vadd.f32 %v346, %v464
    %v466 = vpop.f32.mrb[0].mxu0
    %467 = vmatprep.mubr.f32.mxu0 %v304
    %468 = vmatmul.mubr.f32.gmra.mrb[0].mxu0 %v288
    %v469 = vpop.f32.mrb[0].mxu0
    %v470 = vadd.f32 %v346, %v469
    %v471 = vpop.f32.mrb[0].mxu0
    %472 = vmatprep.mubr.f32.mxu0 %v305
    %473 = vmatmul.mubr.f32.gmra.mrb[0].mxu0 %v289
    %v474 = vpop.f32.mrb[0].mxu0
    %v475 = vadd.f32 %v346, %v474
    %v476 = vpop.f32.mrb[0].mxu0
    %477 = vmatprep.mubr.f32.mxu0 %v306
    %478 = vmatmul.mubr.f32.gmra.mrb[0].mxu0 %v290
    %v479 = vpop.f32.mrb[0].mxu0
    %v480 = vadd.f32 %v346, %v479
    %v481 = vpop.f32.mrb[0].mxu0
    %482 = vmatprep.mubr.f32.mxu0 %v307
    %483 = vmatmul.mubr.f32.gmra.mrb[0].mxu0 %v291
    %v484 = vpop.f32.mrb[0].mxu0
    %v485 = vadd.f32 %v346, %v484
    %v486 = vpop.f32.mrb[0].mxu0
    %487 = vmatprep.mubr.f32.mxu0 %v308
    %488 = vmatmul.mubr.f32.gmra.mrb[0].mxu0 %v292
    %v489 = vpop.f32.mrb[0].mxu0
    %v490 = vadd.f32 %v346, %v489
    %v491 = vpop.f32.mrb[0].mxu0
    %492 = vdwg.mxu0
    %493 = vst [vmem:[%s5] sm:$0xff] %v415
    %494 = vst [vmem:[%s5 + $0x8] sm:$0xff] %v420
    %495 = vst [vmem:[%s5 + $0x10] sm:$0xff] %v425
    %496 = vst [vmem:[%s5 + $0x18] sm:$0xff] %v430
    %497 = vst [vmem:[%s5 + $0x20] sm:$0xff] %v435
    %498 = vst [vmem:[%s5 + $0x28] sm:$0xff] %v440
    %499 = vst [vmem:[%s5 + $0x30] sm:$0xff] %v445
    %500 = vst [vmem:[%s5 + $0x38] sm:$0xff] %v450
    %501 = vst [vmem:[%s5 + $0x40] sm:$0xff] %v455
    %502 = vst [vmem:[%s5 + $0x48] sm:$0xff] %v460
    %503 = vst [vmem:[%s5 + $0x50] sm:$0xff] %v465
    %504 = vst [vmem:[%s5 + $0x58] sm:$0xff] %v470
    %505 = vst [vmem:[%s5 + $0x60] sm:$0xff] %v475
    %506 = vst [vmem:[%s5 + $0x68] sm:$0xff] %v480
    %507 = vst [vmem:[%s5 + $0x70] sm:$0xff] %v485
    %508 = vst [vmem:[%s5 + $0x78] sm:$0xff] %v490
  $region29: #{graphsage_forward.12} parent=0 // pred_fallthru
    _
  // Predicated region
  $region30: #{graphsage_forward.12} parent=0 // pred_check
    _
  $region31: #{graphsage_forward.12} parent=0 // pred_check_branch
    %510 = sbr.rel (0) target = $region33
  $region32: #{graphsage_forward.12} parent=0 // pred_region
    _
  $region33: #{graphsage_forward.12} parent=0 // pred_fallthru
    _
  // Predicated region
  $region34: #{graphsage_forward.12} parent=0 // pred_check
    _
  $region35: #{graphsage_forward.12} parent=0 // pred_check_branch
    %512 = sbr.rel (0) target = $region37
  $region36: #{graphsage_forward.12} parent=0 // pred_region
    _
  $region37: #{graphsage_forward.12} parent=0 // pred_fallthru
    _

</llo_original>
